<compile_context>
chip_gen: v7x
topology: tpu7x:2x2x1
jax: 0.10.0
libtpu: 0.0.40
codegen_flags: <defaults>
</compile_context>

<pallas_src>
import functools

import jax
import jax.numpy as jnp
from jax import lax
from jax.experimental import pallas as pl
from jax.experimental.pallas import tpu as pltpu


def _round_up(n, m):
    return -(-n // m) * m


# ----------------------------------------------------------------------------
# Fused kernel: stacked LSTM recurrence + MLP + sigmoid, fully VMEM-resident.
# One grid step == one sequence.
# ----------------------------------------------------------------------------
def _fused_base_rtf_kernel(x_ref, slab_ref, out_ref, h_scratch, gx_scratch, *,
                           seq_len, hidden, num_lstm_layers, num_mlp_hidden,
                           layout):
    # x_ref      (seq, input_size)              -- this sequence's input
    # slab_ref   (rows, width)                  -- all params, packed row-wise
    # out_ref    (2, seq)    row 0 = hi, row 1 = p
    # h_scratch  VMEM (seq, H)                  -- inter-layer LSTM activations
    # gx_scratch VMEM (seq, 4H)                 -- hoisted input projection
    H = hidden
    li = iter(layout)

    def read(entry):
        off, r, c = entry                      # static offsets (sublane aligned)
        return slab_ref[off:off + r, 0:c]

    unroll = True if seq_len <= 16 else 4      # vreg-pressure guard

    # ------------------------- stacked LSTM ---------------------------------
    layer_in = x_ref[...]                                     # (seq, in)
    for _ in range(num_lstm_layers):
        w_ih = read(next(li))                                 # (in, 4H), g cols pre-scaled x2
        w_hh = read(next(li))                                 # (H, 4H),  g cols pre-scaled x2
        b = read(next(li))                                    # (1, 4H),  g cols pre-scaled x2

        # Hoisted input projection: one MXU pass over all timesteps.
        gx_scratch[...] = (
            jnp.dot(layer_in, w_ih, preferred_element_type=jnp.float32) + b)

        def step(t, carry, w_hh=w_hh):
            h, c = carry                                      # (1, H) each, f32
            gates = gx_scratch[pl.ds(t, 1), :] + jnp.dot(
                h, w_hh, preferred_element_type=jnp.float32)  # (1, 4H)
            # Single full-vreg sigmoid; g gate recovered via tanh(x)=2*sig(2x)-1
            # (its pre-activation columns were pre-scaled by 2 host-side).
            sig = jax.nn.sigmoid(gates)
            # PyTorch gate order: input, forget, cell(g), output.
            i = sig[:, 0 * H:1 * H]
            f = sig[:, 1 * H:2 * H]
            g = 2.0 * sig[:, 2 * H:3 * H] - 1.0
            o = sig[:, 3 * H:4 * H]
            c_new = f * c + i * g
            h_new = o * jnp.tanh(c_new)
            h_scratch[pl.ds(t, 1), :] = h_new
            return (h_new, c_new)

        zeros = jnp.zeros((1, H), jnp.float32)
        lax.fori_loop(0, seq_len, step, (zeros, zeros), unroll=unroll)
        layer_in = h_scratch[...]                             # next layer input
        # Dropout between layers is an eval-time no-op.

    # ------------------------- fused DNN + activation -----------------------
    h = h_scratch[...]                                        # (seq, H)
    for _ in range(num_mlp_hidden):
        w = read(next(li))                                    # (in, out)
        bb = read(next(li))                                   # (1, out)
        h = jnp.maximum(
            jnp.dot(h, w, preferred_element_type=jnp.float32) + bb, 0.0)

    w_out = read(next(li))                                    # (1, H_last)
    b_out = read(next(li))                                    # (1, 1)
    # Final Linear -> 1, emitted lane-dense as a (1, seq) row.
    hi_row = lax.dot_general(
        w_out, h, (((1,), (1,)), ((), ())),
        preferred_element_type=jnp.float32) + b_out           # (1, seq)
    out_ref[0:1, :] = hi_row
    # TODO(synk): select_activate(args.Base_activate) is external; sigmoid is
    # assumed (consistent with the cls_thres-based prediction).
    out_ref[1:2, :] = jax.nn.sigmoid(hi_row)


# ----------------------------------------------------------------------------
# Host-side packing: every parameter into one (rows, width) f32 slab, each
# segment padded to a multiple of 8 rows (sublane aligned) and `width` lanes.
# ----------------------------------------------------------------------------
def _pack(arrs, width):
    pieces, layout, off = [], [], 0
    for a in arrs:
        r, c = a.shape
        r_pad = _round_up(r, 8)
        piece = jnp.zeros((r_pad, width), jnp.float32).at[:r, :c].set(
            a.astype(jnp.float32))
        pieces.append(piece)
        layout.append((off, r, c))
        off += r_pad
    return jnp.concatenate(pieces, axis=0), tuple(layout)


# ----------------------------------------------------------------------------
# Wrapper: single pallas_call for the whole forward pass, grid over sequences.
# ----------------------------------------------------------------------------
@jax.jit
def base_rtf_forward(x, lstm_params, mlp_hidden_params, out_head):
    """x: (B, seq, input_size), batch_first. B=1 matches the module's forward
    exactly; B>1 processes independent sequences via a parallel grid axis."""
    B, seq, in_sz = x.shape
    H = lstm_params[0][1].shape[0]
    num_lstm_layers = len(lstm_params)
    num_mlp_hidden = len(mlp_hidden_params)
    w_out, b_out = out_head

    # Pre-scale the g-gate (cell) columns by 2 so the kernel needs only ONE
    # sigmoid over the full gate vreg per timestep.
    gscale = jnp.concatenate([jnp.ones((2 * H,), jnp.float32),
                              jnp.full((H,), 2.0, jnp.float32),
                              jnp.ones((H,), jnp.float32)])
    arrs = []
    for (w_ih_t, w_hh_t, b) in lstm_params:
        arrs += [w_ih_t * gscale, w_hh_t * gscale, b * gscale]
    for (w_t, bb) in mlp_hidden_params:
        arrs += [w_t, bb]
    arrs += [w_out, b_out]

    max_c = max(a.shape[1] for a in arrs)
    width = _round_up(max(max_c, 128), 128)
    slab, layout = _pack(arrs, width)

    kernel = functools.partial(
        _fused_base_rtf_kernel, seq_len=seq, hidden=H,
        num_lstm_layers=num_lstm_layers, num_mlp_hidden=num_mlp_hidden,
        layout=layout)

    out = pl.pallas_call(
        kernel,
        out_shape=jax.ShapeDtypeStruct((B, 2, seq), jnp.float32),
        grid=(B,),
        in_specs=[pl.BlockSpec((None, seq, in_sz), lambda b: (b, 0, 0)),
                  pl.BlockSpec(slab.shape, lambda b: (0, 0))],
        out_specs=pl.BlockSpec((None, 2, seq), lambda b: (b, 0, 0)),
        scratch_shapes=[pltpu.VMEM((seq, H), jnp.float32),
                        pltpu.VMEM((seq, 4 * H), jnp.float32)],
        compiler_params=pltpu.CompilerParams(
            dimension_semantics=("parallel",)),
    )(x, slab)
    hi = out[:, 0, :]                                         # (B, seq)
    p = out[:, 1, :]                                          # (B, seq)
    return hi, p


# ----------------------------------------------------------------------------
# Pure-JAX reference (correctness verification only; single sequence).
# ----------------------------------------------------------------------------
def base_rtf_reference(x, lstm_params, mlp_hidden_params, out_head):
    h = jnp.squeeze(x, axis=0)                                # (seq, in)
    for (w_ih_t, w_hh_t, b) in lstm_params:
        H = w_hh_t.shape[0]

        def step(carry, x_t, w_ih_t=w_ih_t, w_hh_t=w_hh_t, b=b, H=H):
            hh, cc = carry
            gates = x_t @ w_ih_t + hh @ w_hh_t + b[0]
            i = jax.nn.sigmoid(gates[0 * H:1 * H])
            f = jax.nn.sigmoid(gates[1 * H:2 * H])
            g = jnp.tanh(gates[2 * H:3 * H])
            o = jax.nn.sigmoid(gates[3 * H:4 * H])
            cc = f * cc + i * g
            hh = o * jnp.tanh(cc)
            return (hh, cc), hh

        init = (jnp.zeros((H,), jnp.float32), jnp.zeros((H,), jnp.float32))
        _, h = lax.scan(step, init, h)
    for (w_t, bb) in mlp_hidden_params:
        h = jnp.maximum(h @ w_t + bb[0], 0.0)
    w_out, b_out = out_head
    hi = h @ w_out[0] + b_out[0, 0]
    return hi, jax.nn.sigmoid(hi)


# ----------------------------------------------------------------------------
# Deterministic parameter construction (synthetic init, PyTorch shapes,
# returned in kernel-friendly layout: transposed weights, fused bias rows).
# ----------------------------------------------------------------------------
def make_params(key, input_size, lstm_hidden, num_lstm_layers, dnn_hidden_sizes):
    keys = iter(jax.random.split(key, 64))

    lstm_params = []
    in_sz = input_size
    scale = 1.0 / float(lstm_hidden) ** 0.5
    for _ in range(num_lstm_layers):
        w_ih = jax.random.uniform(next(keys), (4 * lstm_hidden, in_sz),
                                  jnp.float32, -scale, scale)
        w_hh = jax.random.uniform(next(keys), (4 * lstm_hidden, lstm_hidden),
                                  jnp.float32, -scale, scale)
        b_ih = jax.random.uniform(next(keys), (4 * lstm_hidden,),
                                  jnp.float32, -scale, scale)
        b_hh = jax.random.uniform(next(keys), (4 * lstm_hidden,),
                                  jnp.float32, -scale, scale)
        lstm_params.append((w_ih.T, w_hh.T, (b_ih + b_hh)[None, :]))
        in_sz = lstm_hidden

    mlp_hidden_params = []
    in_sz = lstm_hidden
    for h_sz in dnn_hidden_sizes:
        s = 1.0 / float(in_sz) ** 0.5
        w = jax.random.uniform(next(keys), (h_sz, in_sz), jnp.float32, -s, s)
        b = jax.random.uniform(next(keys), (h_sz,), jnp.float32, -s, s)
        mlp_hidden_params.append((w.T, b[None, :]))
        in_sz = h_sz

    s = 1.0 / float(in_sz) ** 0.5
    w_out = jax.random.uniform(next(keys), (1, in_sz), jnp.float32, -s, s)
    b_out = jax.random.uniform(next(keys), (1, 1), jnp.float32, -s, s)
    return lstm_params, mlp_hidden_params, (w_out, b_out)


if __name__ == "__main__":
    # Small config consistent with the module:
    #   input_size=8, Base_lstm_hidden_size=32, Base_num_lstm_layers=2,
    #   Base_dnn_hidden_sizes=[64, 32], seq=8, batch=1.
    input_size = 8
    lstm_hidden = 32
    num_lstm_layers = 2
    dnn_hidden_sizes = [64, 32]
    seq = 8

    key = jax.random.PRNGKey(0)
    k_x, k_p, k_b = jax.random.split(key, 3)

    lstm_params, mlp_hidden_params, out_head = make_params(
        k_p, input_size, lstm_hidden, num_lstm_layers, dnn_hidden_sizes)

    # Unused-in-forward module parameters (kept for completeness).
    theta_train = 1.0 + jax.random.normal(jax.random.PRNGKey(1), (3,), jnp.float32)
    sigma_square = jnp.array([1.0], jnp.float32)
    del theta_train, sigma_square

    # ---- module-exact case: batch == 1 (forward() squeezes the batch dim) ----
    x1 = jax.random.normal(k_x, (1, seq, input_size), jnp.float32)
    hi1, p1 = base_rtf_forward(x1, lstm_params, mlp_hidden_params, out_head)
    jax.block_until_ready((hi1, p1))
    hi1, p1 = hi1[0], p1[0]                                   # (seq,), (seq,)

    hi_ref, p_ref = base_rtf_reference(x1, lstm_params, mlp_hidden_params, out_head)
    assert hi1.shape == (seq,) and p1.shape == (seq,)
    assert bool(jnp.all(jnp.isfinite(hi1))) and bool(jnp.all((p1 >= 0) & (p1 <= 1)))
    assert bool(jnp.allclose(hi1, hi_ref, atol=5e-3, rtol=5e-3)), "hi mismatch vs reference"
    assert bool(jnp.allclose(p1, p_ref, atol=5e-3, rtol=5e-3)), "p mismatch vs reference"

    # ---- batched path: grid over sequences ('parallel' -> megacore on v7x) ----
    batch = 4
    xb = jax.random.normal(k_b, (batch, seq, input_size), jnp.float32)
    hib, pb = base_rtf_forward(xb, lstm_params, mlp_hidden_params, out_head)
    jax.block_until_ready((hib, pb))
    for b in range(batch):
        hr, pr = base_rtf_reference(xb[b:b + 1], lstm_params, mlp_hidden_params, out_head)
        assert bool(jnp.allclose(hib[b], hr, atol=5e-3, rtol=5e-3)), "batched hi mismatch"
        assert bool(jnp.allclose(pb[b], pr, atol=5e-3, rtol=5e-3)), "batched p mismatch"

    print("KERNEL_OK")
</pallas_src>

<mosaic_0001>
module attributes {stable_mosaic.version = 11 : i64} {
  func.func @_fused_base_rtf_kernel(%arg0: i32, %arg1: memref<1x8x8xf32, #tpu.memory_space<vmem>>, %arg2: memref<248x128xf32, #tpu.memory_space<vmem>>, %arg3: memref<1x2x8xf32, #tpu.memory_space<vmem>>, %arg4: memref<8x32xf32, #tpu.memory_space<vmem>>, %arg5: memref<8x128xf32, #tpu.memory_space<vmem>>) attributes {dimension_semantics = [#tpu.dimension_semantics<parallel>], iteration_bounds = array<i64: 1>, scalar_prefetch = 0 : i64, scratch_operands = 2 : i64, tpu.core_type = #tpu.core_type<tc>, window_params = [{transform_indices = @transform_0, window_bounds = array<i64: 1, 8, 8>}, {pipeline_mode = #tpu.pipeline_mode<synchronous>, transform_indices = @transform_1, window_bounds = array<i64: 248, 128>}, {transform_indices = @transform_2, window_bounds = array<i64: 1, 2, 8>}]} {
    %c0 = arith.constant 0 : index
    %c0_0 = arith.constant 0 : index
    %c0_1 = arith.constant 0 : index
    %0 = vector.load %arg1[%c0, %c0_0, %c0_1] : memref<1x8x8xf32, #tpu.memory_space<vmem>>, vector<1x8x8xf32>
    %1 = vector.shape_cast %0 : vector<1x8x8xf32> to vector<8x8xf32>
    %c0_2 = arith.constant 0 : index
    %c0_3 = arith.constant 0 : index
    %2 = vector.load %arg2[%c0_2, %c0_3] : memref<248x128xf32, #tpu.memory_space<vmem>>, vector<8x128xf32>
    %c8 = arith.constant 8 : index
    %c0_4 = arith.constant 0 : index
    %3 = vector.load %arg2[%c8, %c0_4] : memref<248x128xf32, #tpu.memory_space<vmem>>, vector<32x128xf32>
    %c40 = arith.constant 40 : index
    %c0_5 = arith.constant 0 : index
    %4 = vector.load %arg2[%c40, %c0_5] : memref<248x128xf32, #tpu.memory_space<vmem>>, vector<1x128xf32>
    %cst = arith.constant dense<0.000000e+00> : vector<8x128xf32>
    %5 = tpu.matmul %1, %2, %cst {dimension_numbers = #tpu.dot_dimension_numbers<[1], [0], [0], [1], [0, 0, 1, 1], [], []>} : vector<8x8xf32>, vector<8x128xf32>, vector<8x128xf32> -> vector<8x128xf32>
    %6 = vector.broadcast %4 : vector<1x128xf32> to vector<8x128xf32>
    %7 = arith.addf %5, %6 : vector<8x128xf32>
    %c0_6 = arith.constant 0 : index
    %c0_7 = arith.constant 0 : index
    %8 = vector.load %arg5[%c0_6, %c0_7] : memref<8x128xf32, #tpu.memory_space<vmem>>, vector<8x128xf32>
    tpu.vector_store %arg5[%c0_6, %c0_7], %7 {strides = array<i32>} : memref<8x128xf32, #tpu.memory_space<vmem>>, vector<8x128xf32>,
    %cst_8 = arith.constant 0.000000e+00 : f32
    %9 = vector.broadcast %cst_8 : f32 to vector<1x32xf32>
    %c0_i32 = arith.constant 0 : i32
    %10 = arith.index_cast %c0_i32 : i32 to index
    %c0_9 = arith.constant 0 : index
    %11 = vector.load %arg5[%10, %c0_9] : memref<8x128xf32, #tpu.memory_space<vmem>>, vector<1x128xf32>
    %cst_10 = arith.constant dense<0.000000e+00> : vector<1x128xf32>
    %12 = tpu.matmul %9, %3, %cst_10 {dimension_numbers = #tpu.dot_dimension_numbers<[1], [0], [0], [1], [0, 0, 1, 1], [], []>} : vector<1x32xf32>, vector<32x128xf32>, vector<1x128xf32> -> vector<1x128xf32>
    %13 = arith.addf %11, %12 : vector<1x128xf32>
    %14 = arith.negf %13 : vector<1x128xf32>
    %15 = math.exp %14 : vector<1x128xf32>
    %cst_11 = arith.constant 1.000000e+00 : f32
    %16 = vector.broadcast %cst_11 : f32 to vector<1x128xf32>
    %17 = arith.addf %16, %15 : vector<1x128xf32>
    %18 = arith.divf %16, %17 : vector<1x128xf32>
    %19 = vector.extract_strided_slice %18 {offsets = [0, 0], sizes = [1, 32], strides = [1, 1]} : vector<1x128xf32> to vector<1x32xf32>
    %20 = vector.extract_strided_slice %18 {offsets = [0, 32], sizes = [1, 32], strides = [1, 1]} : vector<1x128xf32> to vector<1x32xf32>
    %21 = vector.extract_strided_slice %18 {offsets = [0, 64], sizes = [1, 32], strides = [1, 1]} : vector<1x128xf32> to vector<1x32xf32>
    %cst_12 = arith.constant 2.000000e+00 : f32
    %22 = vector.broadcast %cst_12 : f32 to vector<1x32xf32>
    %23 = arith.mulf %22, %21 : vector<1x32xf32>
    %cst_13 = arith.constant 1.000000e+00 : f32
    %24 = vector.broadcast %cst_13 : f32 to vector<1x32xf32>
    %25 = arith.subf %23, %24 : vector<1x32xf32>
    %26 = vector.extract_strided_slice %18 {offsets = [0, 96], sizes = [1, 32], strides = [1, 1]} : vector<1x128xf32> to vector<1x32xf32>
    %27 = arith.mulf %20, %9 : vector<1x32xf32>
    %28 = arith.mulf %19, %25 : vector<1x32xf32>
    %29 = arith.addf %27, %28 : vector<1x32xf32>
    %30 = math.tanh %29 : vector<1x32xf32>
    %31 = arith.mulf %26, %30 : vector<1x32xf32>
    %32 = arith.index_cast %c0_i32 : i32 to index
    %c0_14 = arith.constant 0 : index
    %33 = vector.load %arg4[%32, %c0_14] : memref<8x32xf32, #tpu.memory_space<vmem>>, vector<1x32xf32>
    tpu.vector_store %arg4[%32, %c0_14], %31 {strides = array<i32>} : memref<8x32xf32, #tpu.memory_space<vmem>>, vector<1x32xf32>,
    %c1_i32 = arith.constant 1 : i32
    %34 = arith.index_cast %c1_i32 : i32 to index
    %c0_15 = arith.constant 0 : index
    %35 = vector.load %arg5[%34, %c0_15] : memref<8x128xf32, #tpu.memory_space<vmem>>, vector<1x128xf32>
    %cst_16 = arith.constant dense<0.000000e+00> : vector<1x128xf32>
    %36 = tpu.matmul %31, %3, %cst_16 {dimension_numbers = #tpu.dot_dimension_numbers<[1], [0], [0], [1], [0, 0, 1, 1], [], []>} : vector<1x32xf32>, vector<32x128xf32>, vector<1x128xf32> -> vector<1x128xf32>
    %37 = arith.addf %35, %36 : vector<1x128xf32>
    %38 = arith.negf %37 : vector<1x128xf32>
    %39 = math.exp %38 : vector<1x128xf32>
    %cst_17 = arith.constant 1.000000e+00 : f32
    %40 = vector.broadcast %cst_17 : f32 to vector<1x128xf32>
    %41 = arith.addf %40, %39 : vector<1x128xf32>
    %42 = arith.divf %40, %41 : vector<1x128xf32>
    %43 = vector.extract_strided_slice %42 {offsets = [0, 0], sizes = [1, 32], strides = [1, 1]} : vector<1x128xf32> to vector<1x32xf32>
    %44 = vector.extract_strided_slice %42 {offsets = [0, 32], sizes = [1, 32], strides = [1, 1]} : vector<1x128xf32> to vector<1x32xf32>
    %45 = vector.extract_strided_slice %42 {offsets = [0, 64], sizes = [1, 32], strides = [1, 1]} : vector<1x128xf32> to vector<1x32xf32>
    %cst_18 = arith.constant 2.000000e+00 : f32
    %46 = vector.broadcast %cst_18 : f32 to vector<1x32xf32>
    %47 = arith.mulf %46, %45 : vector<1x32xf32>
    %cst_19 = arith.constant 1.000000e+00 : f32
    %48 = vector.broadcast %cst_19 : f32 to vector<1x32xf32>
    %49 = arith.subf %47, %48 : vector<1x32xf32>
    %50 = vector.extract_strided_slice %42 {offsets = [0, 96], sizes = [1, 32], strides = [1, 1]} : vector<1x128xf32> to vector<1x32xf32>
    %51 = arith.mulf %44, %29 : vector<1x32xf32>
    %52 = arith.mulf %43, %49 : vector<1x32xf32>
    %53 = arith.addf %51, %52 : vector<1x32xf32>
    %54 = math.tanh %53 : vector<1x32xf32>
    %55 = arith.mulf %50, %54 : vector<1x32xf32>
    %56 = arith.index_cast %c1_i32 : i32 to index
    %c0_20 = arith.constant 0 : index
    %57 = vector.load %arg4[%56, %c0_20] : memref<8x32xf32, #tpu.memory_space<vmem>>, vector<1x32xf32>
    tpu.vector_store %arg4[%56, %c0_20], %55 {strides = array<i32>} : memref<8x32xf32, #tpu.memory_space<vmem>>, vector<1x32xf32>,
    %c2_i32 = arith.constant 2 : i32
    %58 = arith.index_cast %c2_i32 : i32 to index
    %c0_21 = arith.constant 0 : index
    %59 = vector.load %arg5[%58, %c0_21] : memref<8x128xf32, #tpu.memory_space<vmem>>, vector<1x128xf32>
    %cst_22 = arith.constant dense<0.000000e+00> : vector<1x128xf32>
    %60 = tpu.matmul %55, %3, %cst_22 {dimension_numbers = #tpu.dot_dimension_numbers<[1], [0], [0], [1], [0, 0, 1, 1], [], []>} : vector<1x32xf32>, vector<32x128xf32>, vector<1x128xf32> -> vector<1x128xf32>
    %61 = arith.addf %59, %60 : vector<1x128xf32>
    %62 = arith.negf %61 : vector<1x128xf32>
    %63 = math.exp %62 : vector<1x128xf32>
    %cst_23 = arith.constant 1.000000e+00 : f32
    %64 = vector.broadcast %cst_23 : f32 to vector<1x128xf32>
    %65 = arith.addf %64, %63 : vector<1x128xf32>
    %66 = arith.divf %64, %65 : vector<1x128xf32>
    %67 = vector.extract_strided_slice %66 {offsets = [0, 0], sizes = [1, 32], strides = [1, 1]} : vector<1x128xf32> to vector<1x32xf32>
    %68 = vector.extract_strided_slice %66 {offsets = [0, 32], sizes = [1, 32], strides = [1, 1]} : vector<1x128xf32> to vector<1x32xf32>
    %69 = vector.extract_strided_slice %66 {offsets = [0, 64], sizes = [1, 32], strides = [1, 1]} : vector<1x128xf32> to vector<1x32xf32>
    %cst_24 = arith.constant 2.000000e+00 : f32
    %70 = vector.broadcast %cst_24 : f32 to vector<1x32xf32>
    %71 = arith.mulf %70, %69 : vector<1x32xf32>
    %cst_25 = arith.constant 1.000000e+00 : f32
    %72 = vector.broadcast %cst_25 : f32 to vector<1x32xf32>
    %73 = arith.subf %71, %72 : vector<1x32xf32>
    %74 = vector.extract_strided_slice %66 {offsets = [0, 96], sizes = [1, 32], strides = [1, 1]} : vector<1x128xf32> to vector<1x32xf32>
    %75 = arith.mulf %68, %53 : vector<1x32xf32>
    %76 = arith.mulf %67, %73 : vector<1x32xf32>
    %77 = arith.addf %75, %76 : vector<1x32xf32>
    %78 = math.tanh %77 : vector<1x32xf32>
    %79 = arith.mulf %74, %78 : vector<1x32xf32>
    %80 = arith.index_cast %c2_i32 : i32 to index
    %c0_26 = arith.constant 0 : index
    %81 = vector.load %arg4[%80, %c0_26] : memref<8x32xf32, #tpu.memory_space<vmem>>, vector<1x32xf32>
    tpu.vector_store %arg4[%80, %c0_26], %79 {strides = array<i32>} : memref<8x32xf32, #tpu.memory_space<vmem>>, vector<1x32xf32>,
    %c3_i32 = arith.constant 3 : i32
    %82 = arith.index_cast %c3_i32 : i32 to index
    %c0_27 = arith.constant 0 : index
    %83 = vector.load %arg5[%82, %c0_27] : memref<8x128xf32, #tpu.memory_space<vmem>>, vector<1x128xf32>
    %cst_28 = arith.constant dense<0.000000e+00> : vector<1x128xf32>
    %84 = tpu.matmul %79, %3, %cst_28 {dimension_numbers = #tpu.dot_dimension_numbers<[1], [0], [0], [1], [0, 0, 1, 1], [], []>} : vector<1x32xf32>, vector<32x128xf32>, vector<1x128xf32> -> vector<1x128xf32>
    %85 = arith.addf %83, %84 : vector<1x128xf32>
    %86 = arith.negf %85 : vector<1x128xf32>
    %87 = math.exp %86 : vector<1x128xf32>
    %cst_29 = arith.constant 1.000000e+00 : f32
    %88 = vector.broadcast %cst_29 : f32 to vector<1x128xf32>
    %89 = arith.addf %88, %87 : vector<1x128xf32>
    %90 = arith.divf %88, %89 : vector<1x128xf32>
    %91 = vector.extract_strided_slice %90 {offsets = [0, 0], sizes = [1, 32], strides = [1, 1]} : vector<1x128xf32> to vector<1x32xf32>
    %92 = vector.extract_strided_slice %90 {offsets = [0, 32], sizes = [1, 32], strides = [1, 1]} : vector<1x128xf32> to vector<1x32xf32>
    %93 = vector.extract_strided_slice %90 {offsets = [0, 64], sizes = [1, 32], strides = [1, 1]} : vector<1x128xf32> to vector<1x32xf32>
    %cst_30 = arith.constant 2.000000e+00 : f32
    %94 = vector.broadcast %cst_30 : f32 to vector<1x32xf32>
    %95 = arith.mulf %94, %93 : vector<1x32xf32>
    %cst_31 = arith.constant 1.000000e+00 : f32
    %96 = vector.broadcast %cst_31 : f32 to vector<1x32xf32>
    %97 = arith.subf %95, %96 : vector<1x32xf32>
    %98 = vector.extract_strided_slice %90 {offsets = [0, 96], sizes = [1, 32], strides = [1, 1]} : vector<1x128xf32> to vector<1x32xf32>
    %99 = arith.mulf %92, %77 : vector<1x32xf32>
    %100 = arith.mulf %91, %97 : vector<1x32xf32>
    %101 = arith.addf %99, %100 : vector<1x32xf32>
    %102 = math.tanh %101 : vector<1x32xf32>
    %103 = arith.mulf %98, %102 : vector<1x32xf32>
    %104 = arith.index_cast %c3_i32 : i32 to index
    %c0_32 = arith.constant 0 : index
    %105 = vector.load %arg4[%104, %c0_32] : memref<8x32xf32, #tpu.memory_space<vmem>>, vector<1x32xf32>
    tpu.vector_store %arg4[%104, %c0_32], %103 {strides = array<i32>} : memref<8x32xf32, #tpu.memory_space<vmem>>, vector<1x32xf32>,
    %c4_i32 = arith.constant 4 : i32
    %106 = arith.index_cast %c4_i32 : i32 to index
    %c0_33 = arith.constant 0 : index
    %107 = vector.load %arg5[%106, %c0_33] : memref<8x128xf32, #tpu.memory_space<vmem>>, vector<1x128xf32>
    %cst_34 = arith.constant dense<0.000000e+00> : vector<1x128xf32>
    %108 = tpu.matmul %103, %3, %cst_34 {dimension_numbers = #tpu.dot_dimension_numbers<[1], [0], [0], [1], [0, 0, 1, 1], [], []>} : vector<1x32xf32>, vector<32x128xf32>, vector<1x128xf32> -> vector<1x128xf32>
    %109 = arith.addf %107, %108 : vector<1x128xf32>
    %110 = arith.negf %109 : vector<1x128xf32>
    %111 = math.exp %110 : vector<1x128xf32>
    %cst_35 = arith.constant 1.000000e+00 : f32
    %112 = vector.broadcast %cst_35 : f32 to vector<1x128xf32>
    %113 = arith.addf %112, %111 : vector<1x128xf32>
    %114 = arith.divf %112, %113 : vector<1x128xf32>
    %115 = vector.extract_strided_slice %114 {offsets = [0, 0], sizes = [1, 32], strides = [1, 1]} : vector<1x128xf32> to vector<1x32xf32>
    %116 = vector.extract_strided_slice %114 {offsets = [0, 32], sizes = [1, 32], strides = [1, 1]} : vector<1x128xf32> to vector<1x32xf32>
    %117 = vector.extract_strided_slice %114 {offsets = [0, 64], sizes = [1, 32], strides = [1, 1]} : vector<1x128xf32> to vector<1x32xf32>
    %cst_36 = arith.constant 2.000000e+00 : f32
    %118 = vector.broadcast %cst_36 : f32 to vector<1x32xf32>
    %119 = arith.mulf %118, %117 : vector<1x32xf32>
    %cst_37 = arith.constant 1.000000e+00 : f32
    %120 = vector.broadcast %cst_37 : f32 to vector<1x32xf32>
    %121 = arith.subf %119, %120 : vector<1x32xf32>
    %122 = vector.extract_strided_slice %114 {offsets = [0, 96], sizes = [1, 32], strides = [1, 1]} : vector<1x128xf32> to vector<1x32xf32>
    %123 = arith.mulf %116, %101 : vector<1x32xf32>
    %124 = arith.mulf %115, %121 : vector<1x32xf32>
    %125 = arith.addf %123, %124 : vector<1x32xf32>
    %126 = math.tanh %125 : vector<1x32xf32>
    %127 = arith.mulf %122, %126 : vector<1x32xf32>
    %128 = arith.index_cast %c4_i32 : i32 to index
    %c0_38 = arith.constant 0 : index
    %129 = vector.load %arg4[%128, %c0_38] : memref<8x32xf32, #tpu.memory_space<vmem>>, vector<1x32xf32>
    tpu.vector_store %arg4[%128, %c0_38], %127 {strides = array<i32>} : memref<8x32xf32, #tpu.memory_space<vmem>>, vector<1x32xf32>,
    %c5_i32 = arith.constant 5 : i32
    %130 = arith.index_cast %c5_i32 : i32 to index
    %c0_39 = arith.constant 0 : index
    %131 = vector.load %arg5[%130, %c0_39] : memref<8x128xf32, #tpu.memory_space<vmem>>, vector<1x128xf32>
    %cst_40 = arith.constant dense<0.000000e+00> : vector<1x128xf32>
    %132 = tpu.matmul %127, %3, %cst_40 {dimension_numbers = #tpu.dot_dimension_numbers<[1], [0], [0], [1], [0, 0, 1, 1], [], []>} : vector<1x32xf32>, vector<32x128xf32>, vector<1x128xf32> -> vector<1x128xf32>
    %133 = arith.addf %131, %132 : vector<1x128xf32>
    %134 = arith.negf %133 : vector<1x128xf32>
    %135 = math.exp %134 : vector<1x128xf32>
    %cst_41 = arith.constant 1.000000e+00 : f32
    %136 = vector.broadcast %cst_41 : f32 to vector<1x128xf32>
    %137 = arith.addf %136, %135 : vector<1x128xf32>
    %138 = arith.divf %136, %137 : vector<1x128xf32>
    %139 = vector.extract_strided_slice %138 {offsets = [0, 0], sizes = [1, 32], strides = [1, 1]} : vector<1x128xf32> to vector<1x32xf32>
    %140 = vector.extract_strided_slice %138 {offsets = [0, 32], sizes = [1, 32], strides = [1, 1]} : vector<1x128xf32> to vector<1x32xf32>
    %141 = vector.extract_strided_slice %138 {offsets = [0, 64], sizes = [1, 32], strides = [1, 1]} : vector<1x128xf32> to vector<1x32xf32>
    %cst_42 = arith.constant 2.000000e+00 : f32
    %142 = vector.broadcast %cst_42 : f32 to vector<1x32xf32>
    %143 = arith.mulf %142, %141 : vector<1x32xf32>
    %cst_43 = arith.constant 1.000000e+00 : f32
    %144 = vector.broadcast %cst_43 : f32 to vector<1x32xf32>
    %145 = arith.subf %143, %144 : vector<1x32xf32>
    %146 = vector.extract_strided_slice %138 {offsets = [0, 96], sizes = [1, 32], strides = [1, 1]} : vector<1x128xf32> to vector<1x32xf32>
    %147 = arith.mulf %140, %125 : vector<1x32xf32>
    %148 = arith.mulf %139, %145 : vector<1x32xf32>
    %149 = arith.addf %147, %148 : vector<1x32xf32>
    %150 = math.tanh %149 : vector<1x32xf32>
    %151 = arith.mulf %146, %150 : vector<1x32xf32>
    %152 = arith.index_cast %c5_i32 : i32 to index
    %c0_44 = arith.constant 0 : index
    %153 = vector.load %arg4[%152, %c0_44] : memref<8x32xf32, #tpu.memory_space<vmem>>, vector<1x32xf32>
    tpu.vector_store %arg4[%152, %c0_44], %151 {strides = array<i32>} : memref<8x32xf32, #tpu.memory_space<vmem>>, vector<1x32xf32>,
    %c6_i32 = arith.constant 6 : i32
    %154 = arith.index_cast %c6_i32 : i32 to index
    %c0_45 = arith.constant 0 : index
    %155 = vector.load %arg5[%154, %c0_45] : memref<8x128xf32, #tpu.memory_space<vmem>>, vector<1x128xf32>
    %cst_46 = arith.constant dense<0.000000e+00> : vector<1x128xf32>
    %156 = tpu.matmul %151, %3, %cst_46 {dimension_numbers = #tpu.dot_dimension_numbers<[1], [0], [0], [1], [0, 0, 1, 1], [], []>} : vector<1x32xf32>, vector<32x128xf32>, vector<1x128xf32> -> vector<1x128xf32>
    %157 = arith.addf %155, %156 : vector<1x128xf32>
    %158 = arith.negf %157 : vector<1x128xf32>
    %159 = math.exp %158 : vector<1x128xf32>
    %cst_47 = arith.constant 1.000000e+00 : f32
    %160 = vector.broadcast %cst_47 : f32 to vector<1x128xf32>
    %161 = arith.addf %160, %159 : vector<1x128xf32>
    %162 = arith.divf %160, %161 : vector<1x128xf32>
    %163 = vector.extract_strided_slice %162 {offsets = [0, 0], sizes = [1, 32], strides = [1, 1]} : vector<1x128xf32> to vector<1x32xf32>
    %164 = vector.extract_strided_slice %162 {offsets = [0, 32], sizes = [1, 32], strides = [1, 1]} : vector<1x128xf32> to vector<1x32xf32>
    %165 = vector.extract_strided_slice %162 {offsets = [0, 64], sizes = [1, 32], strides = [1, 1]} : vector<1x128xf32> to vector<1x32xf32>
    %cst_48 = arith.constant 2.000000e+00 : f32
    %166 = vector.broadcast %cst_48 : f32 to vector<1x32xf32>
    %167 = arith.mulf %166, %165 : vector<1x32xf32>
    %cst_49 = arith.constant 1.000000e+00 : f32
    %168 = vector.broadcast %cst_49 : f32 to vector<1x32xf32>
    %169 = arith.subf %167, %168 : vector<1x32xf32>
    %170 = vector.extract_strided_slice %162 {offsets = [0, 96], sizes = [1, 32], strides = [1, 1]} : vector<1x128xf32> to vector<1x32xf32>
    %171 = arith.mulf %164, %149 : vector<1x32xf32>
    %172 = arith.mulf %163, %169 : vector<1x32xf32>
    %173 = arith.addf %171, %172 : vector<1x32xf32>
    %174 = math.tanh %173 : vector<1x32xf32>
    %175 = arith.mulf %170, %174 : vector<1x32xf32>
    %176 = arith.index_cast %c6_i32 : i32 to index
    %c0_50 = arith.constant 0 : index
    %177 = vector.load %arg4[%176, %c0_50] : memref<8x32xf32, #tpu.memory_space<vmem>>, vector<1x32xf32>
    tpu.vector_store %arg4[%176, %c0_50], %175 {strides = array<i32>} : memref<8x32xf32, #tpu.memory_space<vmem>>, vector<1x32xf32>,
    %c7_i32 = arith.constant 7 : i32
    %178 = arith.index_cast %c7_i32 : i32 to index
    %c0_51 = arith.constant 0 : index
    %179 = vector.load %arg5[%178, %c0_51] : memref<8x128xf32, #tpu.memory_space<vmem>>, vector<1x128xf32>
    %cst_52 = arith.constant dense<0.000000e+00> : vector<1x128xf32>
    %180 = tpu.matmul %175, %3, %cst_52 {dimension_numbers = #tpu.dot_dimension_numbers<[1], [0], [0], [1], [0, 0, 1, 1], [], []>} : vector<1x32xf32>, vector<32x128xf32>, vector<1x128xf32> -> vector<1x128xf32>
    %181 = arith.addf %179, %180 : vector<1x128xf32>
    %182 = arith.negf %181 : vector<1x128xf32>
    %183 = math.exp %182 : vector<1x128xf32>
    %cst_53 = arith.constant 1.000000e+00 : f32
    %184 = vector.broadcast %cst_53 : f32 to vector<1x128xf32>
    %185 = arith.addf %184, %183 : vector<1x128xf32>
    %186 = arith.divf %184, %185 : vector<1x128xf32>
    %187 = vector.extract_strided_slice %186 {offsets = [0, 0], sizes = [1, 32], strides = [1, 1]} : vector<1x128xf32> to vector<1x32xf32>
    %188 = vector.extract_strided_slice %186 {offsets = [0, 32], sizes = [1, 32], strides = [1, 1]} : vector<1x128xf32> to vector<1x32xf32>
    %189 = vector.extract_strided_slice %186 {offsets = [0, 64], sizes = [1, 32], strides = [1, 1]} : vector<1x128xf32> to vector<1x32xf32>
    %cst_54 = arith.constant 2.000000e+00 : f32
    %190 = vector.broadcast %cst_54 : f32 to vector<1x32xf32>
    %191 = arith.mulf %190, %189 : vector<1x32xf32>
    %cst_55 = arith.constant 1.000000e+00 : f32
    %192 = vector.broadcast %cst_55 : f32 to vector<1x32xf32>
    %193 = arith.subf %191, %192 : vector<1x32xf32>
    %194 = vector.extract_strided_slice %186 {offsets = [0, 96], sizes = [1, 32], strides = [1, 1]} : vector<1x128xf32> to vector<1x32xf32>
    %195 = arith.mulf %188, %173 : vector<1x32xf32>
    %196 = arith.mulf %187, %193 : vector<1x32xf32>
    %197 = arith.addf %195, %196 : vector<1x32xf32>
    %198 = math.tanh %197 : vector<1x32xf32>
    %199 = arith.mulf %194, %198 : vector<1x32xf32>
    %200 = arith.index_cast %c7_i32 : i32 to index
    %c0_56 = arith.constant 0 : index
    %201 = vector.load %arg4[%200, %c0_56] : memref<8x32xf32, #tpu.memory_space<vmem>>, vector<1x32xf32>
    tpu.vector_store %arg4[%200, %c0_56], %199 {strides = array<i32>} : memref<8x32xf32, #tpu.memory_space<vmem>>, vector<1x32xf32>,
    %c8_i32 = arith.constant 8 : i32
    %c0_57 = arith.constant 0 : index
    %c0_58 = arith.constant 0 : index
    %202 = vector.load %arg4[%c0_57, %c0_58] : memref<8x32xf32, #tpu.memory_space<vmem>>, vector<8x32xf32>
    %c48 = arith.constant 48 : index
    %c0_59 = arith.constant 0 : index
    %203 = vector.load %arg2[%c48, %c0_59] : memref<248x128xf32, #tpu.memory_space<vmem>>, vector<32x128xf32>
    %c80 = arith.constant 80 : index
    %c0_60 = arith.constant 0 : index
    %204 = vector.load %arg2[%c80, %c0_60] : memref<248x128xf32, #tpu.memory_space<vmem>>, vector<32x128xf32>
    %c112 = arith.constant 112 : index
    %c0_61 = arith.constant 0 : index
    %205 = vector.load %arg2[%c112, %c0_61] : memref<248x128xf32, #tpu.memory_space<vmem>>, vector<1x128xf32>
    %cst_62 = arith.constant dense<0.000000e+00> : vector<8x128xf32>
    %206 = tpu.matmul %202, %203, %cst_62 {dimension_numbers = #tpu.dot_dimension_numbers<[1], [0], [0], [1], [0, 0, 1, 1], [], []>} : vector<8x32xf32>, vector<32x128xf32>, vector<8x128xf32> -> vector<8x128xf32>
    %207 = vector.broadcast %205 : vector<1x128xf32> to vector<8x128xf32>
    %208 = arith.addf %206, %207 : vector<8x128xf32>
    %c0_63 = arith.constant 0 : index
    %c0_64 = arith.constant 0 : index
    %209 = vector.load %arg5[%c0_63, %c0_64] : memref<8x128xf32, #tpu.memory_space<vmem>>, vector<8x128xf32>
    tpu.vector_store %arg5[%c0_63, %c0_64], %208 {strides = array<i32>} : memref<8x128xf32, #tpu.memory_space<vmem>>, vector<8x128xf32>,
    %cst_65 = arith.constant 0.000000e+00 : f32
    %210 = vector.broadcast %cst_65 : f32 to vector<1x32xf32>
    %c0_i32_66 = arith.constant 0 : i32
    %211 = arith.index_cast %c0_i32_66 : i32 to index
    %c0_67 = arith.constant 0 : index
    %212 = vector.load %arg5[%211, %c0_67] : memref<8x128xf32, #tpu.memory_space<vmem>>, vector<1x128xf32>
    %cst_68 = arith.constant dense<0.000000e+00> : vector<1x128xf32>
    %213 = tpu.matmul %210, %204, %cst_68 {dimension_numbers = #tpu.dot_dimension_numbers<[1], [0], [0], [1], [0, 0, 1, 1], [], []>} : vector<1x32xf32>, vector<32x128xf32>, vector<1x128xf32> -> vector<1x128xf32>
    %214 = arith.addf %212, %213 : vector<1x128xf32>
    %215 = arith.negf %214 : vector<1x128xf32>
    %216 = math.exp %215 : vector<1x128xf32>
    %cst_69 = arith.constant 1.000000e+00 : f32
    %217 = vector.broadcast %cst_69 : f32 to vector<1x128xf32>
    %218 = arith.addf %217, %216 : vector<1x128xf32>
    %219 = arith.divf %217, %218 : vector<1x128xf32>
    %220 = vector.extract_strided_slice %219 {offsets = [0, 0], sizes = [1, 32], strides = [1, 1]} : vector<1x128xf32> to vector<1x32xf32>
    %221 = vector.extract_strided_slice %219 {offsets = [0, 32], sizes = [1, 32], strides = [1, 1]} : vector<1x128xf32> to vector<1x32xf32>
    %222 = vector.extract_strided_slice %219 {offsets = [0, 64], sizes = [1, 32], strides = [1, 1]} : vector<1x128xf32> to vector<1x32xf32>
    %cst_70 = arith.constant 2.000000e+00 : f32
    %223 = vector.broadcast %cst_70 : f32 to vector<1x32xf32>
    %224 = arith.mulf %223, %222 : vector<1x32xf32>
    %cst_71 = arith.constant 1.000000e+00 : f32
    %225 = vector.broadcast %cst_71 : f32 to vector<1x32xf32>
    %226 = arith.subf %224, %225 : vector<1x32xf32>
    %227 = vector.extract_strided_slice %219 {offsets = [0, 96], sizes = [1, 32], strides = [1, 1]} : vector<1x128xf32> to vector<1x32xf32>
    %228 = arith.mulf %221, %210 : vector<1x32xf32>
    %229 = arith.mulf %220, %226 : vector<1x32xf32>
    %230 = arith.addf %228, %229 : vector<1x32xf32>
    %231 = math.tanh %230 : vector<1x32xf32>
    %232 = arith.mulf %227, %231 : vector<1x32xf32>
    %233 = arith.index_cast %c0_i32_66 : i32 to index
    %c0_72 = arith.constant 0 : index
    %234 = vector.load %arg4[%233, %c0_72] : memref<8x32xf32, #tpu.memory_space<vmem>>, vector<1x32xf32>
    tpu.vector_store %arg4[%233, %c0_72], %232 {strides = array<i32>} : memref<8x32xf32, #tpu.memory_space<vmem>>, vector<1x32xf32>,
    %c1_i32_73 = arith.constant 1 : i32
    %235 = arith.index_cast %c1_i32_73 : i32 to index
    %c0_74 = arith.constant 0 : index
    %236 = vector.load %arg5[%235, %c0_74] : memref<8x128xf32, #tpu.memory_space<vmem>>, vector<1x128xf32>
    %cst_75 = arith.constant dense<0.000000e+00> : vector<1x128xf32>
    %237 = tpu.matmul %232, %204, %cst_75 {dimension_numbers = #tpu.dot_dimension_numbers<[1], [0], [0], [1], [0, 0, 1, 1], [], []>} : vector<1x32xf32>, vector<32x128xf32>, vector<1x128xf32> -> vector<1x128xf32>
    %238 = arith.addf %236, %237 : vector<1x128xf32>
    %239 = arith.negf %238 : vector<1x128xf32>
    %240 = math.exp %239 : vector<1x128xf32>
    %cst_76 = arith.constant 1.000000e+00 : f32
    %241 = vector.broadcast %cst_76 : f32 to vector<1x128xf32>
    %242 = arith.addf %241, %240 : vector<1x128xf32>
    %243 = arith.divf %241, %242 : vector<1x128xf32>
    %244 = vector.extract_strided_slice %243 {offsets = [0, 0], sizes = [1, 32], strides = [1, 1]} : vector<1x128xf32> to vector<1x32xf32>
    %245 = vector.extract_strided_slice %243 {offsets = [0, 32], sizes = [1, 32], strides = [1, 1]} : vector<1x128xf32> to vector<1x32xf32>
    %246 = vector.extract_strided_slice %243 {offsets = [0, 64], sizes = [1, 32], strides = [1, 1]} : vector<1x128xf32> to vector<1x32xf32>
    %cst_77 = arith.constant 2.000000e+00 : f32
    %247 = vector.broadcast %cst_77 : f32 to vector<1x32xf32>
    %248 = arith.mulf %247, %246 : vector<1x32xf32>
    %cst_78 = arith.constant 1.000000e+00 : f32
    %249 = vector.broadcast %cst_78 : f32 to vector<1x32xf32>
    %250 = arith.subf %248, %249 : vector<1x32xf32>
    %251 = vector.extract_strided_slice %243 {offsets = [0, 96], sizes = [1, 32], strides = [1, 1]} : vector<1x128xf32> to vector<1x32xf32>
    %252 = arith.mulf %245, %230 : vector<1x32xf32>
    %253 = arith.mulf %244, %250 : vector<1x32xf32>
    %254 = arith.addf %252, %253 : vector<1x32xf32>
    %255 = math.tanh %254 : vector<1x32xf32>
    %256 = arith.mulf %251, %255 : vector<1x32xf32>
    %257 = arith.index_cast %c1_i32_73 : i32 to index
    %c0_79 = arith.constant 0 : index
    %258 = vector.load %arg4[%257, %c0_79] : memref<8x32xf32, #tpu.memory_space<vmem>>, vector<1x32xf32>
    tpu.vector_store %arg4[%257, %c0_79], %256 {strides = array<i32>} : memref<8x32xf32, #tpu.memory_space<vmem>>, vector<1x32xf32>,
    %c2_i32_80 = arith.constant 2 : i32
    %259 = arith.index_cast %c2_i32_80 : i32 to index
    %c0_81 = arith.constant 0 : index
    %260 = vector.load %arg5[%259, %c0_81] : memref<8x128xf32, #tpu.memory_space<vmem>>, vector<1x128xf32>
    %cst_82 = arith.constant dense<0.000000e+00> : vector<1x128xf32>
    %261 = tpu.matmul %256, %204, %cst_82 {dimension_numbers = #tpu.dot_dimension_numbers<[1], [0], [0], [1], [0, 0, 1, 1], [], []>} : vector<1x32xf32>, vector<32x128xf32>, vector<1x128xf32> -> vector<1x128xf32>
    %262 = arith.addf %260, %261 : vector<1x128xf32>
    %263 = arith.negf %262 : vector<1x128xf32>
    %264 = math.exp %263 : vector<1x128xf32>
    %cst_83 = arith.constant 1.000000e+00 : f32
    %265 = vector.broadcast %cst_83 : f32 to vector<1x128xf32>
    %266 = arith.addf %265, %264 : vector<1x128xf32>
    %267 = arith.divf %265, %266 : vector<1x128xf32>
    %268 = vector.extract_strided_slice %267 {offsets = [0, 0], sizes = [1, 32], strides = [1, 1]} : vector<1x128xf32> to vector<1x32xf32>
    %269 = vector.extract_strided_slice %267 {offsets = [0, 32], sizes = [1, 32], strides = [1, 1]} : vector<1x128xf32> to vector<1x32xf32>
    %270 = vector.extract_strided_slice %267 {offsets = [0, 64], sizes = [1, 32], strides = [1, 1]} : vector<1x128xf32> to vector<1x32xf32>
    %cst_84 = arith.constant 2.000000e+00 : f32
    %271 = vector.broadcast %cst_84 : f32 to vector<1x32xf32>
    %272 = arith.mulf %271, %270 : vector<1x32xf32>
    %cst_85 = arith.constant 1.000000e+00 : f32
    %273 = vector.broadcast %cst_85 : f32 to vector<1x32xf32>
    %274 = arith.subf %272, %273 : vector<1x32xf32>
    %275 = vector.extract_strided_slice %267 {offsets = [0, 96], sizes = [1, 32], strides = [1, 1]} : vector<1x128xf32> to vector<1x32xf32>
    %276 = arith.mulf %269, %254 : vector<1x32xf32>
    %277 = arith.mulf %268, %274 : vector<1x32xf32>
    %278 = arith.addf %276, %277 : vector<1x32xf32>
    %279 = math.tanh %278 : vector<1x32xf32>
    %280 = arith.mulf %275, %279 : vector<1x32xf32>
    %281 = arith.index_cast %c2_i32_80 : i32 to index
    %c0_86 = arith.constant 0 : index
    %282 = vector.load %arg4[%281, %c0_86] : memref<8x32xf32, #tpu.memory_space<vmem>>, vector<1x32xf32>
    tpu.vector_store %arg4[%281, %c0_86], %280 {strides = array<i32>} : memref<8x32xf32, #tpu.memory_space<vmem>>, vector<1x32xf32>,
    %c3_i32_87 = arith.constant 3 : i32
    %283 = arith.index_cast %c3_i32_87 : i32 to index
    %c0_88 = arith.constant 0 : index
    %284 = vector.load %arg5[%283, %c0_88] : memref<8x128xf32, #tpu.memory_space<vmem>>, vector<1x128xf32>
    %cst_89 = arith.constant dense<0.000000e+00> : vector<1x128xf32>
    %285 = tpu.matmul %280, %204, %cst_89 {dimension_numbers = #tpu.dot_dimension_numbers<[1], [0], [0], [1], [0, 0, 1, 1], [], []>} : vector<1x32xf32>, vector<32x128xf32>, vector<1x128xf32> -> vector<1x128xf32>
    %286 = arith.addf %284, %285 : vector<1x128xf32>
    %287 = arith.negf %286 : vector<1x128xf32>
    %288 = math.exp %287 : vector<1x128xf32>
    %cst_90 = arith.constant 1.000000e+00 : f32
    %289 = vector.broadcast %cst_90 : f32 to vector<1x128xf32>
    %290 = arith.addf %289, %288 : vector<1x128xf32>
    %291 = arith.divf %289, %290 : vector<1x128xf32>
    %292 = vector.extract_strided_slice %291 {offsets = [0, 0], sizes = [1, 32], strides = [1, 1]} : vector<1x128xf32> to vector<1x32xf32>
    %293 = vector.extract_strided_slice %291 {offsets = [0, 32], sizes = [1, 32], strides = [1, 1]} : vector<1x128xf32> to vector<1x32xf32>
    %294 = vector.extract_strided_slice %291 {offsets = [0, 64], sizes = [1, 32], strides = [1, 1]} : vector<1x128xf32> to vector<1x32xf32>
    %cst_91 = arith.constant 2.000000e+00 : f32
    %295 = vector.broadcast %cst_91 : f32 to vector<1x32xf32>
    %296 = arith.mulf %295, %294 : vector<1x32xf32>
    %cst_92 = arith.constant 1.000000e+00 : f32
    %297 = vector.broadcast %cst_92 : f32 to vector<1x32xf32>
    %298 = arith.subf %296, %297 : vector<1x32xf32>
    %299 = vector.extract_strided_slice %291 {offsets = [0, 96], sizes = [1, 32], strides = [1, 1]} : vector<1x128xf32> to vector<1x32xf32>
    %300 = arith.mulf %293, %278 : vector<1x32xf32>
    %301 = arith.mulf %292, %298 : vector<1x32xf32>
    %302 = arith.addf %300, %301 : vector<1x32xf32>
    %303 = math.tanh %302 : vector<1x32xf32>
    %304 = arith.mulf %299, %303 : vector<1x32xf32>
    %305 = arith.index_cast %c3_i32_87 : i32 to index
    %c0_93 = arith.constant 0 : index
    %306 = vector.load %arg4[%305, %c0_93] : memref<8x32xf32, #tpu.memory_space<vmem>>, vector<1x32xf32>
    tpu.vector_store %arg4[%305, %c0_93], %304 {strides = array<i32>} : memref<8x32xf32, #tpu.memory_space<vmem>>, vector<1x32xf32>,
    %c4_i32_94 = arith.constant 4 : i32
    %307 = arith.index_cast %c4_i32_94 : i32 to index
    %c0_95 = arith.constant 0 : index
    %308 = vector.load %arg5[%307, %c0_95] : memref<8x128xf32, #tpu.memory_space<vmem>>, vector<1x128xf32>
    %cst_96 = arith.constant dense<0.000000e+00> : vector<1x128xf32>
    %309 = tpu.matmul %304, %204, %cst_96 {dimension_numbers = #tpu.dot_dimension_numbers<[1], [0], [0], [1], [0, 0, 1, 1], [], []>} : vector<1x32xf32>, vector<32x128xf32>, vector<1x128xf32> -> vector<1x128xf32>
    %310 = arith.addf %308, %309 : vector<1x128xf32>
    %311 = arith.negf %310 : vector<1x128xf32>
    %312 = math.exp %311 : vector<1x128xf32>
    %cst_97 = arith.constant 1.000000e+00 : f32
    %313 = vector.broadcast %cst_97 : f32 to vector<1x128xf32>
    %314 = arith.addf %313, %312 : vector<1x128xf32>
    %315 = arith.divf %313, %314 : vector<1x128xf32>
    %316 = vector.extract_strided_slice %315 {offsets = [0, 0], sizes = [1, 32], strides = [1, 1]} : vector<1x128xf32> to vector<1x32xf32>
    %317 = vector.extract_strided_slice %315 {offsets = [0, 32], sizes = [1, 32], strides = [1, 1]} : vector<1x128xf32> to vector<1x32xf32>
    %318 = vector.extract_strided_slice %315 {offsets = [0, 64], sizes = [1, 32], strides = [1, 1]} : vector<1x128xf32> to vector<1x32xf32>
    %cst_98 = arith.constant 2.000000e+00 : f32
    %319 = vector.broadcast %cst_98 : f32 to vector<1x32xf32>
    %320 = arith.mulf %319, %318 : vector<1x32xf32>
    %cst_99 = arith.constant 1.000000e+00 : f32
    %321 = vector.broadcast %cst_99 : f32 to vector<1x32xf32>
    %322 = arith.subf %320, %321 : vector<1x32xf32>
    %323 = vector.extract_strided_slice %315 {offsets = [0, 96], sizes = [1, 32], strides = [1, 1]} : vector<1x128xf32> to vector<1x32xf32>
    %324 = arith.mulf %317, %302 : vector<1x32xf32>
    %325 = arith.mulf %316, %322 : vector<1x32xf32>
    %326 = arith.addf %324, %325 : vector<1x32xf32>
    %327 = math.tanh %326 : vector<1x32xf32>
    %328 = arith.mulf %323, %327 : vector<1x32xf32>
    %329 = arith.index_cast %c4_i32_94 : i32 to index
    %c0_100 = arith.constant 0 : index
    %330 = vector.load %arg4[%329, %c0_100] : memref<8x32xf32, #tpu.memory_space<vmem>>, vector<1x32xf32>
    tpu.vector_store %arg4[%329, %c0_100], %328 {strides = array<i32>} : memref<8x32xf32, #tpu.memory_space<vmem>>, vector<1x32xf32>,
    %c5_i32_101 = arith.constant 5 : i32
    %331 = arith.index_cast %c5_i32_101 : i32 to index
    %c0_102 = arith.constant 0 : index
    %332 = vector.load %arg5[%331, %c0_102] : memref<8x128xf32, #tpu.memory_space<vmem>>, vector<1x128xf32>
    %cst_103 = arith.constant dense<0.000000e+00> : vector<1x128xf32>
    %333 = tpu.matmul %328, %204, %cst_103 {dimension_numbers = #tpu.dot_dimension_numbers<[1], [0], [0], [1], [0, 0, 1, 1], [], []>} : vector<1x32xf32>, vector<32x128xf32>, vector<1x128xf32> -> vector<1x128xf32>
    %334 = arith.addf %332, %333 : vector<1x128xf32>
    %335 = arith.negf %334 : vector<1x128xf32>
    %336 = math.exp %335 : vector<1x128xf32>
    %cst_104 = arith.constant 1.000000e+00 : f32
    %337 = vector.broadcast %cst_104 : f32 to vector<1x128xf32>
    %338 = arith.addf %337, %336 : vector<1x128xf32>
    %339 = arith.divf %337, %338 : vector<1x128xf32>
    %340 = vector.extract_strided_slice %339 {offsets = [0, 0], sizes = [1, 32], strides = [1, 1]} : vector<1x128xf32> to vector<1x32xf32>
    %341 = vector.extract_strided_slice %339 {offsets = [0, 32], sizes = [1, 32], strides = [1, 1]} : vector<1x128xf32> to vector<1x32xf32>
    %342 = vector.extract_strided_slice %339 {offsets = [0, 64], sizes = [1, 32], strides = [1, 1]} : vector<1x128xf32> to vector<1x32xf32>
    %cst_105 = arith.constant 2.000000e+00 : f32
    %343 = vector.broadcast %cst_105 : f32 to vector<1x32xf32>
    %344 = arith.mulf %343, %342 : vector<1x32xf32>
    %cst_106 = arith.constant 1.000000e+00 : f32
    %345 = vector.broadcast %cst_106 : f32 to vector<1x32xf32>
    %346 = arith.subf %344, %345 : vector<1x32xf32>
    %347 = vector.extract_strided_slice %339 {offsets = [0, 96], sizes = [1, 32], strides = [1, 1]} : vector<1x128xf32> to vector<1x32xf32>
    %348 = arith.mulf %341, %326 : vector<1x32xf32>
    %349 = arith.mulf %340, %346 : vector<1x32xf32>
    %350 = arith.addf %348, %349 : vector<1x32xf32>
    %351 = math.tanh %350 : vector<1x32xf32>
    %352 = arith.mulf %347, %351 : vector<1x32xf32>
    %353 = arith.index_cast %c5_i32_101 : i32 to index
    %c0_107 = arith.constant 0 : index
    %354 = vector.load %arg4[%353, %c0_107] : memref<8x32xf32, #tpu.memory_space<vmem>>, vector<1x32xf32>
    tpu.vector_store %arg4[%353, %c0_107], %352 {strides = array<i32>} : memref<8x32xf32, #tpu.memory_space<vmem>>, vector<1x32xf32>,
    %c6_i32_108 = arith.constant 6 : i32
    %355 = arith.index_cast %c6_i32_108 : i32 to index
    %c0_109 = arith.constant 0 : index
    %356 = vector.load %arg5[%355, %c0_109] : memref<8x128xf32, #tpu.memory_space<vmem>>, vector<1x128xf32>
    %cst_110 = arith.constant dense<0.000000e+00> : vector<1x128xf32>
    %357 = tpu.matmul %352, %204, %cst_110 {dimension_numbers = #tpu.dot_dimension_numbers<[1], [0], [0], [1], [0, 0, 1, 1], [], []>} : vector<1x32xf32>, vector<32x128xf32>, vector<1x128xf32> -> vector<1x128xf32>
    %358 = arith.addf %356, %357 : vector<1x128xf32>
    %359 = arith.negf %358 : vector<1x128xf32>
    %360 = math.exp %359 : vector<1x128xf32>
    %cst_111 = arith.constant 1.000000e+00 : f32
    %361 = vector.broadcast %cst_111 : f32 to vector<1x128xf32>
    %362 = arith.addf %361, %360 : vector<1x128xf32>
    %363 = arith.divf %361, %362 : vector<1x128xf32>
    %364 = vector.extract_strided_slice %363 {offsets = [0, 0], sizes = [1, 32], strides = [1, 1]} : vector<1x128xf32> to vector<1x32xf32>
    %365 = vector.extract_strided_slice %363 {offsets = [0, 32], sizes = [1, 32], strides = [1, 1]} : vector<1x128xf32> to vector<1x32xf32>
    %366 = vector.extract_strided_slice %363 {offsets = [0, 64], sizes = [1, 32], strides = [1, 1]} : vector<1x128xf32> to vector<1x32xf32>
    %cst_112 = arith.constant 2.000000e+00 : f32
    %367 = vector.broadcast %cst_112 : f32 to vector<1x32xf32>
    %368 = arith.mulf %367, %366 : vector<1x32xf32>
    %cst_113 = arith.constant 1.000000e+00 : f32
    %369 = vector.broadcast %cst_113 : f32 to vector<1x32xf32>
    %370 = arith.subf %368, %369 : vector<1x32xf32>
    %371 = vector.extract_strided_slice %363 {offsets = [0, 96], sizes = [1, 32], strides = [1, 1]} : vector<1x128xf32> to vector<1x32xf32>
    %372 = arith.mulf %365, %350 : vector<1x32xf32>
    %373 = arith.mulf %364, %370 : vector<1x32xf32>
    %374 = arith.addf %372, %373 : vector<1x32xf32>
    %375 = math.tanh %374 : vector<1x32xf32>
    %376 = arith.mulf %371, %375 : vector<1x32xf32>
    %377 = arith.index_cast %c6_i32_108 : i32 to index
    %c0_114 = arith.constant 0 : index
    %378 = vector.load %arg4[%377, %c0_114] : memref<8x32xf32, #tpu.memory_space<vmem>>, vector<1x32xf32>
    tpu.vector_store %arg4[%377, %c0_114], %376 {strides = array<i32>} : memref<8x32xf32, #tpu.memory_space<vmem>>, vector<1x32xf32>,
    %c7_i32_115 = arith.constant 7 : i32
    %379 = arith.index_cast %c7_i32_115 : i32 to index
    %c0_116 = arith.constant 0 : index
    %380 = vector.load %arg5[%379, %c0_116] : memref<8x128xf32, #tpu.memory_space<vmem>>, vector<1x128xf32>
    %cst_117 = arith.constant dense<0.000000e+00> : vector<1x128xf32>
    %381 = tpu.matmul %376, %204, %cst_117 {dimension_numbers = #tpu.dot_dimension_numbers<[1], [0], [0], [1], [0, 0, 1, 1], [], []>} : vector<1x32xf32>, vector<32x128xf32>, vector<1x128xf32> -> vector<1x128xf32>
    %382 = arith.addf %380, %381 : vector<1x128xf32>
    %383 = arith.negf %382 : vector<1x128xf32>
    %384 = math.exp %383 : vector<1x128xf32>
    %cst_118 = arith.constant 1.000000e+00 : f32
    %385 = vector.broadcast %cst_118 : f32 to vector<1x128xf32>
    %386 = arith.addf %385, %384 : vector<1x128xf32>
    %387 = arith.divf %385, %386 : vector<1x128xf32>
    %388 = vector.extract_strided_slice %387 {offsets = [0, 0], sizes = [1, 32], strides = [1, 1]} : vector<1x128xf32> to vector<1x32xf32>
    %389 = vector.extract_strided_slice %387 {offsets = [0, 32], sizes = [1, 32], strides = [1, 1]} : vector<1x128xf32> to vector<1x32xf32>
    %390 = vector.extract_strided_slice %387 {offsets = [0, 64], sizes = [1, 32], strides = [1, 1]} : vector<1x128xf32> to vector<1x32xf32>
    %cst_119 = arith.constant 2.000000e+00 : f32
    %391 = vector.broadcast %cst_119 : f32 to vector<1x32xf32>
    %392 = arith.mulf %391, %390 : vector<1x32xf32>
    %cst_120 = arith.constant 1.000000e+00 : f32
    %393 = vector.broadcast %cst_120 : f32 to vector<1x32xf32>
    %394 = arith.subf %392, %393 : vector<1x32xf32>
    %395 = vector.extract_strided_slice %387 {offsets = [0, 96], sizes = [1, 32], strides = [1, 1]} : vector<1x128xf32> to vector<1x32xf32>
    %396 = arith.mulf %389, %374 : vector<1x32xf32>
    %397 = arith.mulf %388, %394 : vector<1x32xf32>
    %398 = arith.addf %396, %397 : vector<1x32xf32>
    %399 = math.tanh %398 : vector<1x32xf32>
    %400 = arith.mulf %395, %399 : vector<1x32xf32>
    %401 = arith.index_cast %c7_i32_115 : i32 to index
    %c0_121 = arith.constant 0 : index
    %402 = vector.load %arg4[%401, %c0_121] : memref<8x32xf32, #tpu.memory_space<vmem>>, vector<1x32xf32>
    tpu.vector_store %arg4[%401, %c0_121], %400 {strides = array<i32>} : memref<8x32xf32, #tpu.memory_space<vmem>>, vector<1x32xf32>,
    %c8_i32_122 = arith.constant 8 : i32
    %c0_123 = arith.constant 0 : index
    %c0_124 = arith.constant 0 : index
    %403 = vector.load %arg4[%c0_123, %c0_124] : memref<8x32xf32, #tpu.memory_space<vmem>>, vector<8x32xf32>
    %c120 = arith.constant 120 : index
    %c0_125 = arith.constant 0 : index
    %404 = vector.load %arg2[%c120, %c0_125] : memref<248x128xf32, #tpu.memory_space<vmem>>, vector<32x64xf32>
    %c152 = arith.constant 152 : index
    %c0_126 = arith.constant 0 : index
    %405 = vector.load %arg2[%c152, %c0_126] : memref<248x128xf32, #tpu.memory_space<vmem>>, vector<1x64xf32>
    %cst_127 = arith.constant dense<0.000000e+00> : vector<8x64xf32>
    %406 = tpu.matmul %403, %404, %cst_127 {dimension_numbers = #tpu.dot_dimension_numbers<[1], [0], [0], [1], [0, 0, 1, 1], [], []>} : vector<8x32xf32>, vector<32x64xf32>, vector<8x64xf32> -> vector<8x64xf32>
    %407 = vector.broadcast %405 : vector<1x64xf32> to vector<8x64xf32>
    %408 = arith.addf %406, %407 : vector<8x64xf32>
    %cst_128 = arith.constant 0.000000e+00 : f32
    %409 = vector.broadcast %cst_128 : f32 to vector<8x64xf32>
    %410 = arith.maximumf %408, %409 : vector<8x64xf32>
    %c160 = arith.constant 160 : index
    %c0_129 = arith.constant 0 : index
    %411 = vector.load %arg2[%c160, %c0_129] : memref<248x128xf32, #tpu.memory_space<vmem>>, vector<64x32xf32>
    %c224 = arith.constant 224 : index
    %c0_130 = arith.constant 0 : index
    %412 = vector.load %arg2[%c224, %c0_130] : memref<248x128xf32, #tpu.memory_space<vmem>>, vector<1x32xf32>
    %cst_131 = arith.constant dense<0.000000e+00> : vector<8x32xf32>
    %413 = tpu.matmul %410, %411, %cst_131 {dimension_numbers = #tpu.dot_dimension_numbers<[1], [0], [0], [1], [0, 0, 1, 1], [], []>} : vector<8x64xf32>, vector<64x32xf32>, vector<8x32xf32> -> vector<8x32xf32>
    %414 = vector.broadcast %412 : vector<1x32xf32> to vector<8x32xf32>
    %415 = arith.addf %413, %414 : vector<8x32xf32>
    %cst_132 = arith.constant 0.000000e+00 : f32
    %416 = vector.broadcast %cst_132 : f32 to vector<8x32xf32>
    %417 = arith.maximumf %415, %416 : vector<8x32xf32>
    %c232 = arith.constant 232 : index
    %c0_133 = arith.constant 0 : index
    %418 = vector.load %arg2[%c232, %c0_133] : memref<248x128xf32, #tpu.memory_space<vmem>>, vector<1x32xf32>
    %c240 = arith.constant 240 : index
    %c0_134 = arith.constant 0 : index
    %419 = vector.load %arg2[%c240, %c0_134] : memref<248x128xf32, #tpu.memory_space<vmem>>, vector<1x1xf32>
    %cst_135 = arith.constant dense<0.000000e+00> : vector<1x8xf32>
    %420 = tpu.matmul %418, %417, %cst_135 {dimension_numbers = #tpu.dot_dimension_numbers<[1], [1], [0], [0], [0, 0, 1, 0], [], []>} : vector<1x32xf32>, vector<8x32xf32>, vector<1x8xf32> -> vector<1x8xf32>
    %421 = vector.broadcast %419 : vector<1x1xf32> to vector<1x8xf32>
    %422 = arith.addf %420, %421 : vector<1x8xf32>
    %c0_136 = arith.constant 0 : index
    %c0_137 = arith.constant 0 : index
    %c0_138 = arith.constant 0 : index
    %423 = vector.load %arg3[%c0_136, %c0_137, %c0_138] : memref<1x2x8xf32, #tpu.memory_space<vmem>>, vector<1x1x8xf32>
    %424 = vector.shape_cast %423 : vector<1x1x8xf32> to vector<1x8xf32>
    %425 = vector.shape_cast %422 : vector<1x8xf32> to vector<1x1x8xf32>
    tpu.vector_store %arg3[%c0_136, %c0_137, %c0_138], %425 {strides = array<i32>} : memref<1x2x8xf32, #tpu.memory_space<vmem>>, vector<1x1x8xf32>,
    %426 = arith.negf %422 : vector<1x8xf32>
    %427 = math.exp %426 : vector<1x8xf32>
    %cst_139 = arith.constant 1.000000e+00 : f32
    %428 = vector.broadcast %cst_139 : f32 to vector<1x8xf32>
    %429 = arith.addf %428, %427 : vector<1x8xf32>
    %430 = arith.divf %428, %429 : vector<1x8xf32>
    %c0_140 = arith.constant 0 : index
    %c1 = arith.constant 1 : index
    %c0_141 = arith.constant 0 : index
    %431 = vector.load %arg3[%c0_140, %c1, %c0_141] : memref<1x2x8xf32, #tpu.memory_space<vmem>>, vector<1x1x8xf32>
    %432 = vector.shape_cast %431 : vector<1x1x8xf32> to vector<1x8xf32>
    %433 = vector.shape_cast %430 : vector<1x8xf32> to vector<1x1x8xf32>
    tpu.vector_store %arg3[%c0_140, %c1, %c0_141], %433 {strides = array<i32>} : memref<1x2x8xf32, #tpu.memory_space<vmem>>, vector<1x1x8xf32>,
    return
  }
  func.func @transform_0(%arg0: i32) -> (i32, i32, i32) {
    %c0_i32 = arith.constant 0 : i32
    %c0_i32_0 = arith.constant 0 : i32
    %c0_i32_1 = arith.constant 0 : i32
    return %arg0, %c0_i32, %c0_i32_0 : i32, i32, i32
  }
  func.func @transform_1(%arg0: i32) -> (i32, i32) {
    %c0_i32 = arith.constant 0 : i32
    %c0_i32_0 = arith.constant 0 : i32
    %c0_i32_1 = arith.constant 0 : i32
    return %c0_i32, %c0_i32_0 : i32, i32
  }
  func.func @transform_2(%arg0: i32) -> (i32, i32, i32) {
    %c0_i32 = arith.constant 0 : i32
    %c0_i32_0 = arith.constant 0 : i32
    %c0_i32_1 = arith.constant 0 : i32
    return %arg0, %c0_i32, %c0_i32_0 : i32, i32, i32
  }
}

</mosaic_0001>

<llo_original>
// kernel: base_rtf_forward.1
$region0: #{base_rtf_forward.1}
  #allocation0 [shape = 'u32[]', space=smem, size = 0x4, offset = 0x4, fixed_abs, tag = 'smem constant byte address 0x4 - core index']
  #allocation1 [shape = 'u32[144,128]{1,0:T(1,128)}', space=vmem, size = 0x12000, scoped, tag = 'internal scratch']
  #allocation2 [shape = 'f32[8,32]{1,0:T(8,128)}', space=vmem, size = 0x1000, scoped, tag = 'scratch operand']
  #allocation3 [shape = 'f32[8,128]{1,0:T(8,128)}', space=vmem, size = 0x1000, scoped, tag = 'scratch operand']
  %s0 = inlined_call_operand.vmem [shape: f32[1,8,8], index: 0, kind: input, shape index: {}]
  %s1 = inlined_call_operand.vmem [shape: f32[248,128], index: 1, kind: input, shape index: {}]
  %s2 = inlined_call_operand.vmem [shape: f32[1,2,8], index: 2, kind: output, shape index: {}]
  %s3 = sld [smem:[#allocation0]]
  $region18: #{base_rtf_forward.1} parent=0
    _
  %s5 = ssub.s32 1, %s3
  %s6 = scalar_select 0, %s5, %s3
  // Predicated region
  $region2: #{base_rtf_forward.1} parent=0 // pred_check
    _
  $region3: #{base_rtf_forward.1} parent=0 // pred_check_branch
    %8 = sbr.rel (0) target = $region5
  $region4: #{base_rtf_forward.1} parent=0 // pred_region
    _
  $region5: #{base_rtf_forward.1} parent=0 // pred_fallthru
    _
  // Predicated region
  $region6: #{base_rtf_forward.1} parent=0 // pred_check
    _
  $region7: #{base_rtf_forward.1} parent=0 // pred_check_branch
    %10 = sbr.rel (0) target = $region9
  $region8: #{base_rtf_forward.1} parent=0 // pred_region
    _
  $region9: #{base_rtf_forward.1} parent=0 // pred_fallthru
    _
  %v11 = vld [vmem:[%s0] sm:$0xff]
  %v12 = vld [vmem:[%s1] sm:$0xff]
  %v13 = vld [vmem:[%s1 + $0x8] sm:$0xff]
  %v14 = vld [vmem:[%s1 + $0x10] sm:$0xff]
  %v15 = vld [vmem:[%s1 + $0x18] sm:$0xff]
  %v16 = vld [vmem:[%s1 + $0x20] sm:$0xff]
  %v17 = vld [vmem:[%s1 + $0x28] sm:$0x1]
  %v18 = vlaneseq
  %v19 = vshrl.u32 %v18, 7
  %v20 = vsub.s32 0, %v19
  %v21 = vrot.slane %v17, %v20
  %vm22 = vcmask 64512
  %v24 = vsel %vm22, %v11, 0
  %26 = vmatprep.subr.mxu0 0.0
  %27 = vmatpush1.msra.mxu0 %v12
  %28 = vmatprep.subr.mxu0 0.0
  %29 = vmatpush1.msra.mxu0 0.0
  %30 = vmatprep.subr.mxu0 0.0
  %31 = vmatpush1.msra.mxu0 0.0
  %32 = vmatprep.subr.mxu0 0.0
  %33 = vmatpush1.msra.mxu0 0.0
  %34 = vmatprep.subr.mxu0 0.0
  %35 = vmatpush1.msra.mxu0 0.0
  %36 = vmatprep.subr.mxu0 0.0
  %37 = vmatpush1.msra.mxu0 0.0
  %38 = vmatprep.subr.mxu0 0.0
  %39 = vmatpush1.msra.mxu0 0.0
  %40 = vmatprep.subr.mxu0 0.0
  %41 = vmatpush1.msra.mxu0 0.0
  %42 = vmatprep.subr.mxu0 0.0
  %43 = vmatpush1.msra.mxu0 0.0
  %44 = vmatprep.subr.mxu0 0.0
  %45 = vmatpush1.msra.mxu0 0.0
  %46 = vmatprep.subr.mxu0 0.0
  %47 = vmatpush1.msra.mxu0 0.0
  %48 = vmatprep.subr.mxu0 0.0
  %49 = vmatpush1.msra.mxu0 0.0
  %50 = vmatprep.subr.mxu0 0.0
  %51 = vmatpush1.msra.mxu0 0.0
  %52 = vmatprep.subr.mxu0 0.0
  %53 = vmatpush1.msra.mxu0 0.0
  %54 = vmatprep.subr.mxu0 0.0
  %55 = vmatpush1.msra.mxu0 0.0
  %56 = vmatprep.subr.mxu0 0.0
  %57 = vmatpush1.msra.mxu0 0.0
  %58 = vmatprep.subr.mxu0 0.0
  %59 = vmatpush1.msra.mxu0 0.0
  %60 = vmatprep.subr.mxu0 0.0
  %61 = vmatpush1.msra.mxu0 0.0
  %62 = vmatprep.subr.mxu0 0.0
  %63 = vmatpush1.msra.mxu0 0.0
  %64 = vmatprep.subr.mxu0 0.0
  %65 = vmatpush1.msra.mxu0 0.0
  %66 = vmatprep.subr.mxu0 0.0
  %67 = vmatpush1.msra.mxu0 0.0
  %68 = vmatprep.subr.mxu0 0.0
  %69 = vmatpush1.msra.mxu0 0.0
  %70 = vmatprep.subr.mxu0 0.0
  %71 = vmatpush1.msra.mxu0 0.0
  %72 = vmatprep.subr.mxu0 0.0
  %73 = vmatpush1.msra.mxu0 0.0
  %74 = vmatprep.subr.mxu0 0.0
  %75 = vmatpush1.msra.mxu0 0.0
  %76 = vmatprep.subr.mxu0 0.0
  %77 = vmatpush1.msra.mxu0 0.0
  %78 = vmatprep.subr.mxu0 0.0
  %79 = vmatpush1.msra.mxu0 0.0
  %80 = vmatprep.subr.mxu0 0.0
  %81 = vmatpush1.msra.mxu0 0.0
  %82 = vmatprep.subr.mxu0 0.0
  %83 = vmatpush1.msra.mxu0 0.0
  %84 = vmatprep.subr.mxu0 0.0
  %85 = vmatpush1.msra.mxu0 0.0
  %86 = vmatprep.subr.mxu0 0.0
  %87 = vmatpush1.msra.mxu0 0.0
  %88 = vmatprep.subr.mxu0 0.0
  %89 = vmatpush1.msra.mxu0 0.0
  %90 = vmatprep.mubr.f32.mxu0 0.0
  %91 = vmatmul.mubr.f32.gmra.mrb[0].mxu0 %v24
  %v92 = vpop.f32.mrb[0].mxu0
  %v93 = vadd.f32 %v21, %v92
  %v94 = vpop.f32.mrb[0].mxu0
  %95 = vdwg.mxu0
  %96 = vst [vmem:[#allocation3] sm:$0xff] %v93
  %v97 = vld [vmem:[#allocation3] sm:$0x1]
  %vm98 = vcmask 261120
  %v100 = vsel %vm98, 0.0, 0
  %102 = vmatprep.subr.mxu0 0.0
  %103 = vmatpush1.msra.mxu0 %v13
  %104 = vmatprep.subr.mxu0 0.0
  %105 = vmatpush1.msra.mxu0 %v14
  %106 = vmatprep.subr.mxu0 0.0
  %107 = vmatpush1.msra.mxu0 %v15
  %108 = vmatprep.subr.mxu0 0.0
  %109 = vmatpush1.msra.mxu0 %v16
  %110 = vmatprep.subr.mxu0 0.0
  %111 = vmatpush1.msra.mxu0 0.0
  %112 = vmatprep.subr.mxu0 0.0
  %113 = vmatpush1.msra.mxu0 0.0
  %114 = vmatprep.subr.mxu0 0.0
  %115 = vmatpush1.msra.mxu0 0.0
  %116 = vmatprep.subr.mxu0 0.0
  %117 = vmatpush1.msra.mxu0 0.0
  %118 = vmatprep.subr.mxu0 0.0
  %119 = vmatpush1.msra.mxu0 0.0
  %120 = vmatprep.subr.mxu0 0.0
  %121 = vmatpush1.msra.mxu0 0.0
  %122 = vmatprep.subr.mxu0 0.0
  %123 = vmatpush1.msra.mxu0 0.0
  %124 = vmatprep.subr.mxu0 0.0
  %125 = vmatpush1.msra.mxu0 0.0
  %126 = vmatprep.subr.mxu0 0.0
  %127 = vmatpush1.msra.mxu0 0.0
  %128 = vmatprep.subr.mxu0 0.0
  %129 = vmatpush1.msra.mxu0 0.0
  %130 = vmatprep.subr.mxu0 0.0
  %131 = vmatpush1.msra.mxu0 0.0
  %132 = vmatprep.subr.mxu0 0.0
  %133 = vmatpush1.msra.mxu0 0.0
  %134 = vmatprep.subr.mxu0 0.0
  %135 = vmatpush1.msra.mxu0 0.0
  %136 = vmatprep.subr.mxu0 0.0
  %137 = vmatpush1.msra.mxu0 0.0
  %138 = vmatprep.subr.mxu0 0.0
  %139 = vmatpush1.msra.mxu0 0.0
  %140 = vmatprep.subr.mxu0 0.0
  %141 = vmatpush1.msra.mxu0 0.0
  %142 = vmatprep.subr.mxu0 0.0
  %143 = vmatpush1.msra.mxu0 0.0
  %144 = vmatprep.subr.mxu0 0.0
  %145 = vmatpush1.msra.mxu0 0.0
  %146 = vmatprep.subr.mxu0 0.0
  %147 = vmatpush1.msra.mxu0 0.0
  %148 = vmatprep.subr.mxu0 0.0
  %149 = vmatpush1.msra.mxu0 0.0
  %150 = vmatprep.subr.mxu0 0.0
  %151 = vmatpush1.msra.mxu0 0.0
  %152 = vmatprep.subr.mxu0 0.0
  %153 = vmatpush1.msra.mxu0 0.0
  %154 = vmatprep.subr.mxu0 0.0
  %155 = vmatpush1.msra.mxu0 0.0
  %156 = vmatprep.subr.mxu0 0.0
  %157 = vmatpush1.msra.mxu0 0.0
  %158 = vmatprep.subr.mxu0 0.0
  %159 = vmatpush1.msra.mxu0 0.0
  %160 = vmatprep.subr.mxu0 0.0
  %161 = vmatpush1.msra.mxu0 0.0
  %162 = vmatprep.subr.mxu0 0.0
  %163 = vmatpush1.msra.mxu0 0.0
  %164 = vmatprep.subr.mxu0 0.0
  %165 = vmatpush1.msra.mxu0 0.0
  %166 = vmatprep.mubr.f32.mxu0 0.0
  %167 = vmatmul.mubr.f32.gmra.mrb[0].mxu0 %v100
  %v168 = vpop.f32.mrb[0].mxu0
  %v169 = vadd.f32 0.0, %v168
  %v170 = vpop.f32.mrb[0].mxu0
  %171 = vdwg.mxu0
  %v172 = vadd.f32 %v97, %v169
  %v173 = vxor.u32 %v172, 2147483648
  %v174 = vmul.f32 %v173, 1.442695
  %v175 = vpow.pop %v174
  %v176 = vadd.f32 %v175, 1.0
  %v177 = vrcp.pop %v176
  %v178 = vmul.f32 1.0, %v177
  %v179 = vmul.f32 %v178, 2.0
  %v180 = vsub.f32 %v179, 1.0
  %v181 = vmul.f32 %v178, 0.0
  %183 = vrot.lane.b32.xlu0 %v180, 64
  %v184 = vpop.permute.xlu0 %183
  %v186 = vmul.f32 %v178, %v184
  %188 = vrot.lane.b32.xlu0 %v186, 32
  %v189 = vpop.permute.xlu0 %188
  %v191 = vadd.f32 %v181, %v189
  %v192 = vtanh.pop %v191
  %194 = vrot.lane.b32.xlu0 %v192, 64
  %v195 = vpop.permute.xlu0 %194
  %v197 = vmul.f32 %v178, %v195
  %199 = vrot.lane.b32.xlu0 %v197, 32
  %v200 = vpop.permute.xlu0 %199
  %vm202 = vcmask 253952
  %203 = vst.msk [vmem:[#allocation2] sm:$0x1] %vm202, %v200
  %v204 = vld [vmem:[#allocation3 + $0x1] sm:$0x1]
  %v205 = vsel %vm98, %v200, 0
  %207 = vmatprep.subr.mxu0 0.0
  %208 = vmatpush1.msra.mxu0 %v13
  %209 = vmatprep.subr.mxu0 0.0
  %210 = vmatpush1.msra.mxu0 %v14
  %211 = vmatprep.subr.mxu0 0.0
  %212 = vmatpush1.msra.mxu0 %v15
  %213 = vmatprep.subr.mxu0 0.0
  %214 = vmatpush1.msra.mxu0 %v16
  %215 = vmatprep.subr.mxu0 0.0
  %216 = vmatpush1.msra.mxu0 0.0
  %217 = vmatprep.subr.mxu0 0.0
  %218 = vmatpush1.msra.mxu0 0.0
  %219 = vmatprep.subr.mxu0 0.0
  %220 = vmatpush1.msra.mxu0 0.0
  %221 = vmatprep.subr.mxu0 0.0
  %222 = vmatpush1.msra.mxu0 0.0
  %223 = vmatprep.subr.mxu0 0.0
  %224 = vmatpush1.msra.mxu0 0.0
  %225 = vmatprep.subr.mxu0 0.0
  %226 = vmatpush1.msra.mxu0 0.0
  %227 = vmatprep.subr.mxu0 0.0
  %228 = vmatpush1.msra.mxu0 0.0
  %229 = vmatprep.subr.mxu0 0.0
  %230 = vmatpush1.msra.mxu0 0.0
  %231 = vmatprep.subr.mxu0 0.0
  %232 = vmatpush1.msra.mxu0 0.0
  %233 = vmatprep.subr.mxu0 0.0
  %234 = vmatpush1.msra.mxu0 0.0
  %235 = vmatprep.subr.mxu0 0.0
  %236 = vmatpush1.msra.mxu0 0.0
  %237 = vmatprep.subr.mxu0 0.0
  %238 = vmatpush1.msra.mxu0 0.0
  %239 = vmatprep.subr.mxu0 0.0
  %240 = vmatpush1.msra.mxu0 0.0
  %241 = vmatprep.subr.mxu0 0.0
  %242 = vmatpush1.msra.mxu0 0.0
  %243 = vmatprep.subr.mxu0 0.0
  %244 = vmatpush1.msra.mxu0 0.0
  %245 = vmatprep.subr.mxu0 0.0
  %246 = vmatpush1.msra.mxu0 0.0
  %247 = vmatprep.subr.mxu0 0.0
  %248 = vmatpush1.msra.mxu0 0.0
  %249 = vmatprep.subr.mxu0 0.0
  %250 = vmatpush1.msra.mxu0 0.0
  %251 = vmatprep.subr.mxu0 0.0
  %252 = vmatpush1.msra.mxu0 0.0
  %253 = vmatprep.subr.mxu0 0.0
  %254 = vmatpush1.msra.mxu0 0.0
  %255 = vmatprep.subr.mxu0 0.0
  %256 = vmatpush1.msra.mxu0 0.0
  %257 = vmatprep.subr.mxu0 0.0
  %258 = vmatpush1.msra.mxu0 0.0
  %259 = vmatprep.subr.mxu0 0.0
  %260 = vmatpush1.msra.mxu0 0.0
  %261 = vmatprep.subr.mxu0 0.0
  %262 = vmatpush1.msra.mxu0 0.0
  %263 = vmatprep.subr.mxu0 0.0
  %264 = vmatpush1.msra.mxu0 0.0
  %265 = vmatprep.subr.mxu0 0.0
  %266 = vmatpush1.msra.mxu0 0.0
  %267 = vmatprep.subr.mxu0 0.0
  %268 = vmatpush1.msra.mxu0 0.0
  %269 = vmatprep.subr.mxu0 0.0
  %270 = vmatpush1.msra.mxu0 0.0
  %271 = vmatprep.mubr.f32.mxu0 0.0
  %272 = vmatmul.mubr.f32.gmra.mrb[0].mxu0 %v205
  %v273 = vpop.f32.mrb[0].mxu0
  %v274 = vadd.f32 0.0, %v273
  %v275 = vpop.f32.mrb[0].mxu0
  %276 = vdwg.mxu0
  %v277 = vadd.f32 %v204, %v274
  %v278 = vxor.u32 %v277, 2147483648
  %v279 = vmul.f32 %v278, 1.442695
  %v280 = vpow.pop %v279
  %v281 = vadd.f32 %v280, 1.0
  %v282 = vrcp.pop %v281
  %v283 = vmul.f32 1.0, %v282
  %v284 = vmul.f32 %v283, 2.0
  %v285 = vsub.f32 %v284, 1.0
  %v286 = vmul.f32 %v283, %v191
  %288 = vrot.lane.b32.xlu0 %v285, 64
  %v289 = vpop.permute.xlu0 %288
  %v291 = vmul.f32 %v283, %v289
  %293 = vrot.lane.b32.xlu0 %v291, 32
  %v294 = vpop.permute.xlu0 %293
  %v296 = vadd.f32 %v286, %v294
  %v297 = vtanh.pop %v296
  %299 = vrot.lane.b32.xlu0 %v297, 64
  %v300 = vpop.permute.xlu0 %299
  %v302 = vmul.f32 %v283, %v300
  %304 = vrot.lane.b32.xlu0 %v302, 32
  %v305 = vpop.permute.xlu0 %304
  %307 = vst.msk [vmem:[#allocation2 + $0x1] sm:$0x1] %vm202, %v305
  %v308 = vld [vmem:[#allocation3 + $0x2] sm:$0x1]
  %v309 = vsel %vm98, %v305, 0
  %311 = vmatprep.subr.mxu0 0.0
  %312 = vmatpush1.msra.mxu0 %v13
  %313 = vmatprep.subr.mxu0 0.0
  %314 = vmatpush1.msra.mxu0 %v14
  %315 = vmatprep.subr.mxu0 0.0
  %316 = vmatpush1.msra.mxu0 %v15
  %317 = vmatprep.subr.mxu0 0.0
  %318 = vmatpush1.msra.mxu0 %v16
  %319 = vmatprep.subr.mxu0 0.0
  %320 = vmatpush1.msra.mxu0 0.0
  %321 = vmatprep.subr.mxu0 0.0
  %322 = vmatpush1.msra.mxu0 0.0
  %323 = vmatprep.subr.mxu0 0.0
  %324 = vmatpush1.msra.mxu0 0.0
  %325 = vmatprep.subr.mxu0 0.0
  %326 = vmatpush1.msra.mxu0 0.0
  %327 = vmatprep.subr.mxu0 0.0
  %328 = vmatpush1.msra.mxu0 0.0
  %329 = vmatprep.subr.mxu0 0.0
  %330 = vmatpush1.msra.mxu0 0.0
  %331 = vmatprep.subr.mxu0 0.0
  %332 = vmatpush1.msra.mxu0 0.0
  %333 = vmatprep.subr.mxu0 0.0
  %334 = vmatpush1.msra.mxu0 0.0
  %335 = vmatprep.subr.mxu0 0.0
  %336 = vmatpush1.msra.mxu0 0.0
  %337 = vmatprep.subr.mxu0 0.0
  %338 = vmatpush1.msra.mxu0 0.0
  %339 = vmatprep.subr.mxu0 0.0
  %340 = vmatpush1.msra.mxu0 0.0
  %341 = vmatprep.subr.mxu0 0.0
  %342 = vmatpush1.msra.mxu0 0.0
  %343 = vmatprep.subr.mxu0 0.0
  %344 = vmatpush1.msra.mxu0 0.0
  %345 = vmatprep.subr.mxu0 0.0
  %346 = vmatpush1.msra.mxu0 0.0
  %347 = vmatprep.subr.mxu0 0.0
  %348 = vmatpush1.msra.mxu0 0.0
  %349 = vmatprep.subr.mxu0 0.0
  %350 = vmatpush1.msra.mxu0 0.0
  %351 = vmatprep.subr.mxu0 0.0
  %352 = vmatpush1.msra.mxu0 0.0
  %353 = vmatprep.subr.mxu0 0.0
  %354 = vmatpush1.msra.mxu0 0.0
  %355 = vmatprep.subr.mxu0 0.0
  %356 = vmatpush1.msra.mxu0 0.0
  %357 = vmatprep.subr.mxu0 0.0
  %358 = vmatpush1.msra.mxu0 0.0
  %359 = vmatprep.subr.mxu0 0.0
  %360 = vmatpush1.msra.mxu0 0.0
  %361 = vmatprep.subr.mxu0 0.0
  %362 = vmatpush1.msra.mxu0 0.0
  %363 = vmatprep.subr.mxu0 0.0
  %364 = vmatpush1.msra.mxu0 0.0
  %365 = vmatprep.subr.mxu0 0.0
  %366 = vmatpush1.msra.mxu0 0.0
  %367 = vmatprep.subr.mxu0 0.0
  %368 = vmatpush1.msra.mxu0 0.0
  %369 = vmatprep.subr.mxu0 0.0
  %370 = vmatpush1.msra.mxu0 0.0
  %371 = vmatprep.subr.mxu0 0.0
  %372 = vmatpush1.msra.mxu0 0.0
  %373 = vmatprep.subr.mxu0 0.0
  %374 = vmatpush1.msra.mxu0 0.0
  %375 = vmatprep.mubr.f32.mxu0 0.0
  %376 = vmatmul.mubr.f32.gmra.mrb[0].mxu0 %v309
  %v377 = vpop.f32.mrb[0].mxu0
  %v378 = vadd.f32 0.0, %v377
  %v379 = vpop.f32.mrb[0].mxu0
  %380 = vdwg.mxu0
  %v381 = vadd.f32 %v308, %v378
  %v382 = vxor.u32 %v381, 2147483648
  %v383 = vmul.f32 %v382, 1.442695
  %v384 = vpow.pop %v383
  %v385 = vadd.f32 %v384, 1.0
  %v386 = vrcp.pop %v385
  %v387 = vmul.f32 1.0, %v386
  %v388 = vmul.f32 %v387, 2.0
  %v389 = vsub.f32 %v388, 1.0
  %v390 = vmul.f32 %v387, %v296
  %392 = vrot.lane.b32.xlu0 %v389, 64
  %v393 = vpop.permute.xlu0 %392
  %v395 = vmul.f32 %v387, %v393
  %397 = vrot.lane.b32.xlu0 %v395, 32
  %v398 = vpop.permute.xlu0 %397
  %v400 = vadd.f32 %v390, %v398
  %v401 = vtanh.pop %v400
  %403 = vrot.lane.b32.xlu0 %v401, 64
  %v404 = vpop.permute.xlu0 %403
  %v406 = vmul.f32 %v387, %v404
  %408 = vrot.lane.b32.xlu0 %v406, 32
  %v409 = vpop.permute.xlu0 %408
  %411 = vst.msk [vmem:[#allocation2 + $0x2] sm:$0x1] %vm202, %v409
  %v412 = vld [vmem:[#allocation3 + $0x3] sm:$0x1]
  %v413 = vsel %vm98, %v409, 0
  %415 = vmatprep.subr.mxu0 0.0
  %416 = vmatpush1.msra.mxu0 %v13
  %417 = vmatprep.subr.mxu0 0.0
  %418 = vmatpush1.msra.mxu0 %v14
  %419 = vmatprep.subr.mxu0 0.0
  %420 = vmatpush1.msra.mxu0 %v15
  %421 = vmatprep.subr.mxu0 0.0
  %422 = vmatpush1.msra.mxu0 %v16
  %423 = vmatprep.subr.mxu0 0.0
  %424 = vmatpush1.msra.mxu0 0.0
  %425 = vmatprep.subr.mxu0 0.0
  %426 = vmatpush1.msra.mxu0 0.0
  %427 = vmatprep.subr.mxu0 0.0
  %428 = vmatpush1.msra.mxu0 0.0
  %429 = vmatprep.subr.mxu0 0.0
  %430 = vmatpush1.msra.mxu0 0.0
  %431 = vmatprep.subr.mxu0 0.0
  %432 = vmatpush1.msra.mxu0 0.0
  %433 = vmatprep.subr.mxu0 0.0
  %434 = vmatpush1.msra.mxu0 0.0
  %435 = vmatprep.subr.mxu0 0.0
  %436 = vmatpush1.msra.mxu0 0.0
  %437 = vmatprep.subr.mxu0 0.0
  %438 = vmatpush1.msra.mxu0 0.0
  %439 = vmatprep.subr.mxu0 0.0
  %440 = vmatpush1.msra.mxu0 0.0
  %441 = vmatprep.subr.mxu0 0.0
  %442 = vmatpush1.msra.mxu0 0.0
  %443 = vmatprep.subr.mxu0 0.0
  %444 = vmatpush1.msra.mxu0 0.0
  %445 = vmatprep.subr.mxu0 0.0
  %446 = vmatpush1.msra.mxu0 0.0
  %447 = vmatprep.subr.mxu0 0.0
  %448 = vmatpush1.msra.mxu0 0.0
  %449 = vmatprep.subr.mxu0 0.0
  %450 = vmatpush1.msra.mxu0 0.0
  %451 = vmatprep.subr.mxu0 0.0
  %452 = vmatpush1.msra.mxu0 0.0
  %453 = vmatprep.subr.mxu0 0.0
  %454 = vmatpush1.msra.mxu0 0.0
  %455 = vmatprep.subr.mxu0 0.0
  %456 = vmatpush1.msra.mxu0 0.0
  %457 = vmatprep.subr.mxu0 0.0
  %458 = vmatpush1.msra.mxu0 0.0
  %459 = vmatprep.subr.mxu0 0.0
  %460 = vmatpush1.msra.mxu0 0.0
  %461 = vmatprep.subr.mxu0 0.0
  %462 = vmatpush1.msra.mxu0 0.0
  %463 = vmatprep.subr.mxu0 0.0
  %464 = vmatpush1.msra.mxu0 0.0
  %465 = vmatprep.subr.mxu0 0.0
  %466 = vmatpush1.msra.mxu0 0.0
  %467 = vmatprep.subr.mxu0 0.0
  %468 = vmatpush1.msra.mxu0 0.0
  %469 = vmatprep.subr.mxu0 0.0
  %470 = vmatpush1.msra.mxu0 0.0
  %471 = vmatprep.subr.mxu0 0.0
  %472 = vmatpush1.msra.mxu0 0.0
  %473 = vmatprep.subr.mxu0 0.0
  %474 = vmatpush1.msra.mxu0 0.0
  %475 = vmatprep.subr.mxu0 0.0
  %476 = vmatpush1.msra.mxu0 0.0
  %477 = vmatprep.subr.mxu0 0.0
  %478 = vmatpush1.msra.mxu0 0.0
  %479 = vmatprep.mubr.f32.mxu0 0.0
  %480 = vmatmul.mubr.f32.gmra.mrb[0].mxu0 %v413
  %v481 = vpop.f32.mrb[0].mxu0
  %v482 = vadd.f32 0.0, %v481
  %v483 = vpop.f32.mrb[0].mxu0
  %484 = vdwg.mxu0
  %v485 = vadd.f32 %v412, %v482
  %v486 = vxor.u32 %v485, 2147483648
  %v487 = vmul.f32 %v486, 1.442695
  %v488 = vpow.pop %v487
  %v489 = vadd.f32 %v488, 1.0
  %v490 = vrcp.pop %v489
  %v491 = vmul.f32 1.0, %v490
  %v492 = vmul.f32 %v491, 2.0
  %v493 = vsub.f32 %v492, 1.0
  %v494 = vmul.f32 %v491, %v400
  %496 = vrot.lane.b32.xlu0 %v493, 64
  %v497 = vpop.permute.xlu0 %496
  %v499 = vmul.f32 %v491, %v497
  %501 = vrot.lane.b32.xlu0 %v499, 32
  %v502 = vpop.permute.xlu0 %501
  %v504 = vadd.f32 %v494, %v502
  %v505 = vtanh.pop %v504
  %507 = vrot.lane.b32.xlu0 %v505, 64
  %v508 = vpop.permute.xlu0 %507
  %v510 = vmul.f32 %v491, %v508
  %512 = vrot.lane.b32.xlu0 %v510, 32
  %v513 = vpop.permute.xlu0 %512
  %515 = vst.msk [vmem:[#allocation2 + $0x3] sm:$0x1] %vm202, %v513
  %v516 = vld [vmem:[#allocation3 + $0x4] sm:$0x1]
  %v517 = vsel %vm98, %v513, 0
  %519 = vmatprep.subr.mxu0 0.0
  %520 = vmatpush1.msra.mxu0 %v13
  %521 = vmatprep.subr.mxu0 0.0
  %522 = vmatpush1.msra.mxu0 %v14
  %523 = vmatprep.subr.mxu0 0.0
  %524 = vmatpush1.msra.mxu0 %v15
  %525 = vmatprep.subr.mxu0 0.0
  %526 = vmatpush1.msra.mxu0 %v16
  %527 = vmatprep.subr.mxu0 0.0
  %528 = vmatpush1.msra.mxu0 0.0
  %529 = vmatprep.subr.mxu0 0.0
  %530 = vmatpush1.msra.mxu0 0.0
  %531 = vmatprep.subr.mxu0 0.0
  %532 = vmatpush1.msra.mxu0 0.0
  %533 = vmatprep.subr.mxu0 0.0
  %534 = vmatpush1.msra.mxu0 0.0
  %535 = vmatprep.subr.mxu0 0.0
  %536 = vmatpush1.msra.mxu0 0.0
  %537 = vmatprep.subr.mxu0 0.0
  %538 = vmatpush1.msra.mxu0 0.0
  %539 = vmatprep.subr.mxu0 0.0
  %540 = vmatpush1.msra.mxu0 0.0
  %541 = vmatprep.subr.mxu0 0.0
  %542 = vmatpush1.msra.mxu0 0.0
  %543 = vmatprep.subr.mxu0 0.0
  %544 = vmatpush1.msra.mxu0 0.0
  %545 = vmatprep.subr.mxu0 0.0
  %546 = vmatpush1.msra.mxu0 0.0
  %547 = vmatprep.subr.mxu0 0.0
  %548 = vmatpush1.msra.mxu0 0.0
  %549 = vmatprep.subr.mxu0 0.0
  %550 = vmatpush1.msra.mxu0 0.0
  %551 = vmatprep.subr.mxu0 0.0
  %552 = vmatpush1.msra.mxu0 0.0
  %553 = vmatprep.subr.mxu0 0.0
  %554 = vmatpush1.msra.mxu0 0.0
  %555 = vmatprep.subr.mxu0 0.0
  %556 = vmatpush1.msra.mxu0 0.0
  %557 = vmatprep.subr.mxu0 0.0
  %558 = vmatpush1.msra.mxu0 0.0
  %559 = vmatprep.subr.mxu0 0.0
  %560 = vmatpush1.msra.mxu0 0.0
  %561 = vmatprep.subr.mxu0 0.0
  %562 = vmatpush1.msra.mxu0 0.0
  %563 = vmatprep.subr.mxu0 0.0
  %564 = vmatpush1.msra.mxu0 0.0
  %565 = vmatprep.subr.mxu0 0.0
  %566 = vmatpush1.msra.mxu0 0.0
  %567 = vmatprep.subr.mxu0 0.0
  %568 = vmatpush1.msra.mxu0 0.0
  %569 = vmatprep.subr.mxu0 0.0
  %570 = vmatpush1.msra.mxu0 0.0
  %571 = vmatprep.subr.mxu0 0.0
  %572 = vmatpush1.msra.mxu0 0.0
  %573 = vmatprep.subr.mxu0 0.0
  %574 = vmatpush1.msra.mxu0 0.0
  %575 = vmatprep.subr.mxu0 0.0
  %576 = vmatpush1.msra.mxu0 0.0
  %577 = vmatprep.subr.mxu0 0.0
  %578 = vmatpush1.msra.mxu0 0.0
  %579 = vmatprep.subr.mxu0 0.0
  %580 = vmatpush1.msra.mxu0 0.0
  %581 = vmatprep.subr.mxu0 0.0
  %582 = vmatpush1.msra.mxu0 0.0
  %583 = vmatprep.mubr.f32.mxu0 0.0
  %584 = vmatmul.mubr.f32.gmra.mrb[0].mxu0 %v517
  %v585 = vpop.f32.mrb[0].mxu0
  %v586 = vadd.f32 0.0, %v585
  %v587 = vpop.f32.mrb[0].mxu0
  %588 = vdwg.mxu0
  %v589 = vadd.f32 %v516, %v586
  %v590 = vxor.u32 %v589, 2147483648
  %v591 = vmul.f32 %v590, 1.442695
  %v592 = vpow.pop %v591
  %v593 = vadd.f32 %v592, 1.0
  %v594 = vrcp.pop %v593
  %v595 = vmul.f32 1.0, %v594
  %v596 = vmul.f32 %v595, 2.0
  %v597 = vsub.f32 %v596, 1.0
  %v598 = vmul.f32 %v595, %v504
  %600 = vrot.lane.b32.xlu0 %v597, 64
  %v601 = vpop.permute.xlu0 %600
  %v603 = vmul.f32 %v595, %v601
  %605 = vrot.lane.b32.xlu0 %v603, 32
  %v606 = vpop.permute.xlu0 %605
  %v608 = vadd.f32 %v598, %v606
  %v609 = vtanh.pop %v608
  %611 = vrot.lane.b32.xlu0 %v609, 64
  %v612 = vpop.permute.xlu0 %611
  %v614 = vmul.f32 %v595, %v612
  %616 = vrot.lane.b32.xlu0 %v614, 32
  %v617 = vpop.permute.xlu0 %616
  %619 = vst.msk [vmem:[#allocation2 + $0x4] sm:$0x1] %vm202, %v617
  %v620 = vld [vmem:[#allocation3 + $0x5] sm:$0x1]
  %v621 = vsel %vm98, %v617, 0
  %623 = vmatprep.subr.mxu0 0.0
  %624 = vmatpush1.msra.mxu0 %v13
  %625 = vmatprep.subr.mxu0 0.0
  %626 = vmatpush1.msra.mxu0 %v14
  %627 = vmatprep.subr.mxu0 0.0
  %628 = vmatpush1.msra.mxu0 %v15
  %629 = vmatprep.subr.mxu0 0.0
  %630 = vmatpush1.msra.mxu0 %v16
  %631 = vmatprep.subr.mxu0 0.0
  %632 = vmatpush1.msra.mxu0 0.0
  %633 = vmatprep.subr.mxu0 0.0
  %634 = vmatpush1.msra.mxu0 0.0
  %635 = vmatprep.subr.mxu0 0.0
  %636 = vmatpush1.msra.mxu0 0.0
  %637 = vmatprep.subr.mxu0 0.0
  %638 = vmatpush1.msra.mxu0 0.0
  %639 = vmatprep.subr.mxu0 0.0
  %640 = vmatpush1.msra.mxu0 0.0
  %641 = vmatprep.subr.mxu0 0.0
  %642 = vmatpush1.msra.mxu0 0.0
  %643 = vmatprep.subr.mxu0 0.0
  %644 = vmatpush1.msra.mxu0 0.0
  %645 = vmatprep.subr.mxu0 0.0
  %646 = vmatpush1.msra.mxu0 0.0
  %647 = vmatprep.subr.mxu0 0.0
  %648 = vmatpush1.msra.mxu0 0.0
  %649 = vmatprep.subr.mxu0 0.0
  %650 = vmatpush1.msra.mxu0 0.0
  %651 = vmatprep.subr.mxu0 0.0
  %652 = vmatpush1.msra.mxu0 0.0
  %653 = vmatprep.subr.mxu0 0.0
  %654 = vmatpush1.msra.mxu0 0.0
  %655 = vmatprep.subr.mxu0 0.0
  %656 = vmatpush1.msra.mxu0 0.0
  %657 = vmatprep.subr.mxu0 0.0
  %658 = vmatpush1.msra.mxu0 0.0
  %659 = vmatprep.subr.mxu0 0.0
  %660 = vmatpush1.msra.mxu0 0.0
  %661 = vmatprep.subr.mxu0 0.0
  %662 = vmatpush1.msra.mxu0 0.0
  %663 = vmatprep.subr.mxu0 0.0
  %664 = vmatpush1.msra.mxu0 0.0
  %665 = vmatprep.subr.mxu0 0.0
  %666 = vmatpush1.msra.mxu0 0.0
  %667 = vmatprep.subr.mxu0 0.0
  %668 = vmatpush1.msra.mxu0 0.0
  %669 = vmatprep.subr.mxu0 0.0
  %670 = vmatpush1.msra.mxu0 0.0
  %671 = vmatprep.subr.mxu0 0.0
  %672 = vmatpush1.msra.mxu0 0.0
  %673 = vmatprep.subr.mxu0 0.0
  %674 = vmatpush1.msra.mxu0 0.0
  %675 = vmatprep.subr.mxu0 0.0
  %676 = vmatpush1.msra.mxu0 0.0
  %677 = vmatprep.subr.mxu0 0.0
  %678 = vmatpush1.msra.mxu0 0.0
  %679 = vmatprep.subr.mxu0 0.0
  %680 = vmatpush1.msra.mxu0 0.0
  %681 = vmatprep.subr.mxu0 0.0
  %682 = vmatpush1.msra.mxu0 0.0
  %683 = vmatprep.subr.mxu0 0.0
  %684 = vmatpush1.msra.mxu0 0.0
  %685 = vmatprep.subr.mxu0 0.0
  %686 = vmatpush1.msra.mxu0 0.0
  %687 = vmatprep.mubr.f32.mxu0 0.0
  %688 = vmatmul.mubr.f32.gmra.mrb[0].mxu0 %v621
  %v689 = vpop.f32.mrb[0].mxu0
  %v690 = vadd.f32 0.0, %v689
  %v691 = vpop.f32.mrb[0].mxu0
  %692 = vdwg.mxu0
  %v693 = vadd.f32 %v620, %v690
  %v694 = vxor.u32 %v693, 2147483648
  %v695 = vmul.f32 %v694, 1.442695
  %v696 = vpow.pop %v695
  %v697 = vadd.f32 %v696, 1.0
  %v698 = vrcp.pop %v697
  %v699 = vmul.f32 1.0, %v698
  %v700 = vmul.f32 %v699, 2.0
  %v701 = vsub.f32 %v700, 1.0
  %v702 = vmul.f32 %v699, %v608
  %704 = vrot.lane.b32.xlu0 %v701, 64
  %v705 = vpop.permute.xlu0 %704
  %v707 = vmul.f32 %v699, %v705
  %709 = vrot.lane.b32.xlu0 %v707, 32
  %v710 = vpop.permute.xlu0 %709
  %v712 = vadd.f32 %v702, %v710
  %v713 = vtanh.pop %v712
  %715 = vrot.lane.b32.xlu0 %v713, 64
  %v716 = vpop.permute.xlu0 %715
  %v718 = vmul.f32 %v699, %v716
  %720 = vrot.lane.b32.xlu0 %v718, 32
  %v721 = vpop.permute.xlu0 %720
  %723 = vst.msk [vmem:[#allocation2 + $0x5] sm:$0x1] %vm202, %v721
  %v724 = vld [vmem:[#allocation3 + $0x6] sm:$0x1]
  %v725 = vsel %vm98, %v721, 0
  %727 = vmatprep.subr.mxu0 0.0
  %728 = vmatpush1.msra.mxu0 %v13
  %729 = vmatprep.subr.mxu0 0.0
  %730 = vmatpush1.msra.mxu0 %v14
  %731 = vmatprep.subr.mxu0 0.0
  %732 = vmatpush1.msra.mxu0 %v15
  %733 = vmatprep.subr.mxu0 0.0
  %734 = vmatpush1.msra.mxu0 %v16
  %735 = vmatprep.subr.mxu0 0.0
  %736 = vmatpush1.msra.mxu0 0.0
  %737 = vmatprep.subr.mxu0 0.0
  %738 = vmatpush1.msra.mxu0 0.0
  %739 = vmatprep.subr.mxu0 0.0
  %740 = vmatpush1.msra.mxu0 0.0
  %741 = vmatprep.subr.mxu0 0.0
  %742 = vmatpush1.msra.mxu0 0.0
  %743 = vmatprep.subr.mxu0 0.0
  %744 = vmatpush1.msra.mxu0 0.0
  %745 = vmatprep.subr.mxu0 0.0
  %746 = vmatpush1.msra.mxu0 0.0
  %747 = vmatprep.subr.mxu0 0.0
  %748 = vmatpush1.msra.mxu0 0.0
  %749 = vmatprep.subr.mxu0 0.0
  %750 = vmatpush1.msra.mxu0 0.0
  %751 = vmatprep.subr.mxu0 0.0
  %752 = vmatpush1.msra.mxu0 0.0
  %753 = vmatprep.subr.mxu0 0.0
  %754 = vmatpush1.msra.mxu0 0.0
  %755 = vmatprep.subr.mxu0 0.0
  %756 = vmatpush1.msra.mxu0 0.0
  %757 = vmatprep.subr.mxu0 0.0
  %758 = vmatpush1.msra.mxu0 0.0
  %759 = vmatprep.subr.mxu0 0.0
  %760 = vmatpush1.msra.mxu0 0.0
  %761 = vmatprep.subr.mxu0 0.0
  %762 = vmatpush1.msra.mxu0 0.0
  %763 = vmatprep.subr.mxu0 0.0
  %764 = vmatpush1.msra.mxu0 0.0
  %765 = vmatprep.subr.mxu0 0.0
  %766 = vmatpush1.msra.mxu0 0.0
  %767 = vmatprep.subr.mxu0 0.0
  %768 = vmatpush1.msra.mxu0 0.0
  %769 = vmatprep.subr.mxu0 0.0
  %770 = vmatpush1.msra.mxu0 0.0
  %771 = vmatprep.subr.mxu0 0.0
  %772 = vmatpush1.msra.mxu0 0.0
  %773 = vmatprep.subr.mxu0 0.0
  %774 = vmatpush1.msra.mxu0 0.0
  %775 = vmatprep.subr.mxu0 0.0
  %776 = vmatpush1.msra.mxu0 0.0
  %777 = vmatprep.subr.mxu0 0.0
  %778 = vmatpush1.msra.mxu0 0.0
  %779 = vmatprep.subr.mxu0 0.0
  %780 = vmatpush1.msra.mxu0 0.0
  %781 = vmatprep.subr.mxu0 0.0
  %782 = vmatpush1.msra.mxu0 0.0
  %783 = vmatprep.subr.mxu0 0.0
  %784 = vmatpush1.msra.mxu0 0.0
  %785 = vmatprep.subr.mxu0 0.0
  %786 = vmatpush1.msra.mxu0 0.0
  %787 = vmatprep.subr.mxu0 0.0
  %788 = vmatpush1.msra.mxu0 0.0
  %789 = vmatprep.subr.mxu0 0.0
  %790 = vmatpush1.msra.mxu0 0.0
  %791 = vmatprep.mubr.f32.mxu0 0.0
  %792 = vmatmul.mubr.f32.gmra.mrb[0].mxu0 %v725
  %v793 = vpop.f32.mrb[0].mxu0
  %v794 = vadd.f32 0.0, %v793
  %v795 = vpop.f32.mrb[0].mxu0
  %796 = vdwg.mxu0
  %v797 = vadd.f32 %v724, %v794
  %v798 = vxor.u32 %v797, 2147483648
  %v799 = vmul.f32 %v798, 1.442695
  %v800 = vpow.pop %v799
  %v801 = vadd.f32 %v800, 1.0
  %v802 = vrcp.pop %v801
  %v803 = vmul.f32 1.0, %v802
  %v804 = vmul.f32 %v803, 2.0
  %v805 = vsub.f32 %v804, 1.0
  %v806 = vmul.f32 %v803, %v712
  %808 = vrot.lane.b32.xlu0 %v805, 64
  %v809 = vpop.permute.xlu0 %808
  %v811 = vmul.f32 %v803, %v809
  %813 = vrot.lane.b32.xlu0 %v811, 32
  %v814 = vpop.permute.xlu0 %813
  %v816 = vadd.f32 %v806, %v814
  %v817 = vtanh.pop %v816
  %819 = vrot.lane.b32.xlu0 %v817, 64
  %v820 = vpop.permute.xlu0 %819
  %v822 = vmul.f32 %v803, %v820
  %824 = vrot.lane.b32.xlu0 %v822, 32
  %v825 = vpop.permute.xlu0 %824
  %827 = vst.msk [vmem:[#allocation2 + $0x6] sm:$0x1] %vm202, %v825
  %v828 = vld [vmem:[#allocation3 + $0x7] sm:$0x1]
  %v829 = vsel %vm98, %v825, 0
  %831 = vmatprep.subr.mxu0 0.0
  %832 = vmatpush1.msra.mxu0 %v13
  %833 = vmatprep.subr.mxu0 0.0
  %834 = vmatpush1.msra.mxu0 %v14
  %835 = vmatprep.subr.mxu0 0.0
  %836 = vmatpush1.msra.mxu0 %v15
  %837 = vmatprep.subr.mxu0 0.0
  %838 = vmatpush1.msra.mxu0 %v16
  %839 = vmatprep.subr.mxu0 0.0
  %840 = vmatpush1.msra.mxu0 0.0
  %841 = vmatprep.subr.mxu0 0.0
  %842 = vmatpush1.msra.mxu0 0.0
  %843 = vmatprep.subr.mxu0 0.0
  %844 = vmatpush1.msra.mxu0 0.0
  %845 = vmatprep.subr.mxu0 0.0
  %846 = vmatpush1.msra.mxu0 0.0
  %847 = vmatprep.subr.mxu0 0.0
  %848 = vmatpush1.msra.mxu0 0.0
  %849 = vmatprep.subr.mxu0 0.0
  %850 = vmatpush1.msra.mxu0 0.0
  %851 = vmatprep.subr.mxu0 0.0
  %852 = vmatpush1.msra.mxu0 0.0
  %853 = vmatprep.subr.mxu0 0.0
  %854 = vmatpush1.msra.mxu0 0.0
  %855 = vmatprep.subr.mxu0 0.0
  %856 = vmatpush1.msra.mxu0 0.0
  %857 = vmatprep.subr.mxu0 0.0
  %858 = vmatpush1.msra.mxu0 0.0
  %859 = vmatprep.subr.mxu0 0.0
  %860 = vmatpush1.msra.mxu0 0.0
  %861 = vmatprep.subr.mxu0 0.0
  %862 = vmatpush1.msra.mxu0 0.0
  %863 = vmatprep.subr.mxu0 0.0
  %864 = vmatpush1.msra.mxu0 0.0
  %865 = vmatprep.subr.mxu0 0.0
  %866 = vmatpush1.msra.mxu0 0.0
  %867 = vmatprep.subr.mxu0 0.0
  %868 = vmatpush1.msra.mxu0 0.0
  %869 = vmatprep.subr.mxu0 0.0
  %870 = vmatpush1.msra.mxu0 0.0
  %871 = vmatprep.subr.mxu0 0.0
  %872 = vmatpush1.msra.mxu0 0.0
  %873 = vmatprep.subr.mxu0 0.0
  %874 = vmatpush1.msra.mxu0 0.0
  %875 = vmatprep.subr.mxu0 0.0
  %876 = vmatpush1.msra.mxu0 0.0
  %877 = vmatprep.subr.mxu0 0.0
  %878 = vmatpush1.msra.mxu0 0.0
  %879 = vmatprep.subr.mxu0 0.0
  %880 = vmatpush1.msra.mxu0 0.0
  %881 = vmatprep.subr.mxu0 0.0
  %882 = vmatpush1.msra.mxu0 0.0
  %883 = vmatprep.subr.mxu0 0.0
  %884 = vmatpush1.msra.mxu0 0.0
  %885 = vmatprep.subr.mxu0 0.0
  %886 = vmatpush1.msra.mxu0 0.0
  %887 = vmatprep.subr.mxu0 0.0
  %888 = vmatpush1.msra.mxu0 0.0
  %889 = vmatprep.subr.mxu0 0.0
  %890 = vmatpush1.msra.mxu0 0.0
  %891 = vmatprep.subr.mxu0 0.0
  %892 = vmatpush1.msra.mxu0 0.0
  %893 = vmatprep.subr.mxu0 0.0
  %894 = vmatpush1.msra.mxu0 0.0
  %895 = vmatprep.mubr.f32.mxu0 0.0
  %896 = vmatmul.mubr.f32.gmra.mrb[0].mxu0 %v829
  %v897 = vpop.f32.mrb[0].mxu0
  %v898 = vadd.f32 0.0, %v897
  %v899 = vpop.f32.mrb[0].mxu0
  %900 = vdwg.mxu0
  %v901 = vadd.f32 %v828, %v898
  %v902 = vxor.u32 %v901, 2147483648
  %v903 = vmul.f32 %v902, 1.442695
  %v904 = vpow.pop %v903
  %v905 = vadd.f32 %v904, 1.0
  %v906 = vrcp.pop %v905
  %v907 = vmul.f32 1.0, %v906
  %v908 = vmul.f32 %v907, 2.0
  %v909 = vsub.f32 %v908, 1.0
  %v910 = vmul.f32 %v907, %v816
  %912 = vrot.lane.b32.xlu0 %v909, 64
  %v913 = vpop.permute.xlu0 %912
  %v915 = vmul.f32 %v907, %v913
  %917 = vrot.lane.b32.xlu0 %v915, 32
  %v918 = vpop.permute.xlu0 %917
  %v920 = vadd.f32 %v910, %v918
  %v921 = vtanh.pop %v920
  %923 = vrot.lane.b32.xlu0 %v921, 64
  %v924 = vpop.permute.xlu0 %923
  %v926 = vmul.f32 %v907, %v924
  %928 = vrot.lane.b32.xlu0 %v926, 32
  %v929 = vpop.permute.xlu0 %928
  %931 = vst.msk [vmem:[#allocation2 + $0x7] sm:$0x1] %vm202, %v929
  %v932 = vld [vmem:[#allocation2] sm:$0xff]
  %v933 = vld [vmem:[%s1 + $0x30] sm:$0xff]
  %v934 = vld [vmem:[%s1 + $0x38] sm:$0xff]
  %v935 = vld [vmem:[%s1 + $0x40] sm:$0xff]
  %v936 = vld [vmem:[%s1 + $0x48] sm:$0xff]
  %v937 = vld [vmem:[%s1 + $0x50] sm:$0xff]
  %v938 = vld [vmem:[%s1 + $0x58] sm:$0xff]
  %v939 = vld [vmem:[%s1 + $0x60] sm:$0xff]
  %v940 = vld [vmem:[%s1 + $0x68] sm:$0xff]
  %v941 = vld [vmem:[%s1 + $0x70] sm:$0x1]
  %v942 = vlaneseq
  %v943 = vshrl.u32 %v942, 7
  %v944 = vsub.s32 0, %v943
  %v945 = vrot.slane %v941, %v944
  %v947 = vsel %vm98, %v932, 0
  %949 = vmatprep.subr.mxu0 0.0
  %950 = vmatpush1.msra.mxu0 %v933
  %951 = vmatprep.subr.mxu0 0.0
  %952 = vmatpush1.msra.mxu0 %v934
  %953 = vmatprep.subr.mxu0 0.0
  %954 = vmatpush1.msra.mxu0 %v935
  %955 = vmatprep.subr.mxu0 0.0
  %956 = vmatpush1.msra.mxu0 %v936
  %957 = vmatprep.subr.mxu0 0.0
  %958 = vmatpush1.msra.mxu0 0.0
  %959 = vmatprep.subr.mxu0 0.0
  %960 = vmatpush1.msra.mxu0 0.0
  %961 = vmatprep.subr.mxu0 0.0
  %962 = vmatpush1.msra.mxu0 0.0
  %963 = vmatprep.subr.mxu0 0.0
  %964 = vmatpush1.msra.mxu0 0.0
  %965 = vmatprep.subr.mxu0 0.0
  %966 = vmatpush1.msra.mxu0 0.0
  %967 = vmatprep.subr.mxu0 0.0
  %968 = vmatpush1.msra.mxu0 0.0
  %969 = vmatprep.subr.mxu0 0.0
  %970 = vmatpush1.msra.mxu0 0.0
  %971 = vmatprep.subr.mxu0 0.0
  %972 = vmatpush1.msra.mxu0 0.0
  %973 = vmatprep.subr.mxu0 0.0
  %974 = vmatpush1.msra.mxu0 0.0
  %975 = vmatprep.subr.mxu0 0.0
  %976 = vmatpush1.msra.mxu0 0.0
  %977 = vmatprep.subr.mxu0 0.0
  %978 = vmatpush1.msra.mxu0 0.0
  %979 = vmatprep.subr.mxu0 0.0
  %980 = vmatpush1.msra.mxu0 0.0
  %981 = vmatprep.subr.mxu0 0.0
  %982 = vmatpush1.msra.mxu0 0.0
  %983 = vmatprep.subr.mxu0 0.0
  %984 = vmatpush1.msra.mxu0 0.0
  %985 = vmatprep.subr.mxu0 0.0
  %986 = vmatpush1.msra.mxu0 0.0
  %987 = vmatprep.subr.mxu0 0.0
  %988 = vmatpush1.msra.mxu0 0.0
  %989 = vmatprep.subr.mxu0 0.0
  %990 = vmatpush1.msra.mxu0 0.0
  %991 = vmatprep.subr.mxu0 0.0
  %992 = vmatpush1.msra.mxu0 0.0
  %993 = vmatprep.subr.mxu0 0.0
  %994 = vmatpush1.msra.mxu0 0.0
  %995 = vmatprep.subr.mxu0 0.0
  %996 = vmatpush1.msra.mxu0 0.0
  %997 = vmatprep.subr.mxu0 0.0
  %998 = vmatpush1.msra.mxu0 0.0
  %999 = vmatprep.subr.mxu0 0.0
  %1000 = vmatpush1.msra.mxu0 0.0
  %1001 = vmatprep.subr.mxu0 0.0
  %1002 = vmatpush1.msra.mxu0 0.0
  %1003 = vmatprep.subr.mxu0 0.0
  %1004 = vmatpush1.msra.mxu0 0.0
  %1005 = vmatprep.subr.mxu0 0.0
  %1006 = vmatpush1.msra.mxu0 0.0
  %1007 = vmatprep.subr.mxu0 0.0
  %1008 = vmatpush1.msra.mxu0 0.0
  %1009 = vmatprep.subr.mxu0 0.0
  %1010 = vmatpush1.msra.mxu0 0.0
  %1011 = vmatprep.subr.mxu0 0.0
  %1012 = vmatpush1.msra.mxu0 0.0
  %1013 = vmatprep.mubr.f32.mxu0 0.0
  %1014 = vmatmul.mubr.f32.gmra.mrb[0].mxu0 %v947
  %v1015 = vpop.f32.mrb[0].mxu0
  %v1016 = vadd.f32 %v945, %v1015
  %v1017 = vpop.f32.mrb[0].mxu0
  %1018 = vdwg.mxu0
  %1019 = vst [vmem:[#allocation3] sm:$0xff] %v1016
  %v1020 = vld [vmem:[#allocation3] sm:$0x1]
  %1021 = vmatprep.subr.mxu0 0.0
  %1022 = vmatpush1.msra.mxu0 %v937
  %1023 = vmatprep.subr.mxu0 0.0
  %1024 = vmatpush1.msra.mxu0 %v938
  %1025 = vmatprep.subr.mxu0 0.0
  %1026 = vmatpush1.msra.mxu0 %v939
  %1027 = vmatprep.subr.mxu0 0.0
  %1028 = vmatpush1.msra.mxu0 %v940
  %1029 = vmatprep.subr.mxu0 0.0
  %1030 = vmatpush1.msra.mxu0 0.0
  %1031 = vmatprep.subr.mxu0 0.0
  %1032 = vmatpush1.msra.mxu0 0.0
  %1033 = vmatprep.subr.mxu0 0.0
  %1034 = vmatpush1.msra.mxu0 0.0
  %1035 = vmatprep.subr.mxu0 0.0
  %1036 = vmatpush1.msra.mxu0 0.0
  %1037 = vmatprep.subr.mxu0 0.0
  %1038 = vmatpush1.msra.mxu0 0.0
  %1039 = vmatprep.subr.mxu0 0.0
  %1040 = vmatpush1.msra.mxu0 0.0
  %1041 = vmatprep.subr.mxu0 0.0
  %1042 = vmatpush1.msra.mxu0 0.0
  %1043 = vmatprep.subr.mxu0 0.0
  %1044 = vmatpush1.msra.mxu0 0.0
  %1045 = vmatprep.subr.mxu0 0.0
  %1046 = vmatpush1.msra.mxu0 0.0
  %1047 = vmatprep.subr.mxu0 0.0
  %1048 = vmatpush1.msra.mxu0 0.0
  %1049 = vmatprep.subr.mxu0 0.0
  %1050 = vmatpush1.msra.mxu0 0.0
  %1051 = vmatprep.subr.mxu0 0.0
  %1052 = vmatpush1.msra.mxu0 0.0
  %1053 = vmatprep.subr.mxu0 0.0
  %1054 = vmatpush1.msra.mxu0 0.0
  %1055 = vmatprep.subr.mxu0 0.0
  %1056 = vmatpush1.msra.mxu0 0.0
  %1057 = vmatprep.subr.mxu0 0.0
  %1058 = vmatpush1.msra.mxu0 0.0
  %1059 = vmatprep.subr.mxu0 0.0
  %1060 = vmatpush1.msra.mxu0 0.0
  %1061 = vmatprep.subr.mxu0 0.0
  %1062 = vmatpush1.msra.mxu0 0.0
  %1063 = vmatprep.subr.mxu0 0.0
  %1064 = vmatpush1.msra.mxu0 0.0
  %1065 = vmatprep.subr.mxu0 0.0
  %1066 = vmatpush1.msra.mxu0 0.0
  %1067 = vmatprep.subr.mxu0 0.0
  %1068 = vmatpush1.msra.mxu0 0.0
  %1069 = vmatprep.subr.mxu0 0.0
  %1070 = vmatpush1.msra.mxu0 0.0
  %1071 = vmatprep.subr.mxu0 0.0
  %1072 = vmatpush1.msra.mxu0 0.0
  %1073 = vmatprep.subr.mxu0 0.0
  %1074 = vmatpush1.msra.mxu0 0.0
  %1075 = vmatprep.subr.mxu0 0.0
  %1076 = vmatpush1.msra.mxu0 0.0
  %1077 = vmatprep.subr.mxu0 0.0
  %1078 = vmatpush1.msra.mxu0 0.0
  %1079 = vmatprep.subr.mxu0 0.0
  %1080 = vmatpush1.msra.mxu0 0.0
  %1081 = vmatprep.subr.mxu0 0.0
  %1082 = vmatpush1.msra.mxu0 0.0
  %1083 = vmatprep.subr.mxu0 0.0
  %1084 = vmatpush1.msra.mxu0 0.0
  %1085 = vmatprep.mubr.f32.mxu0 0.0
  %1086 = vmatmul.mubr.f32.gmra.mrb[0].mxu0 %v100
  %v1087 = vpop.f32.mrb[0].mxu0
  %v1088 = vadd.f32 0.0, %v1087
  %v1089 = vpop.f32.mrb[0].mxu0
  %1090 = vdwg.mxu0
  %v1091 = vadd.f32 %v1020, %v1088
  %v1092 = vxor.u32 %v1091, 2147483648
  %v1093 = vmul.f32 %v1092, 1.442695
  %v1094 = vpow.pop %v1093
  %v1095 = vadd.f32 %v1094, 1.0
  %v1096 = vrcp.pop %v1095
  %v1097 = vmul.f32 1.0, %v1096
  %v1098 = vmul.f32 %v1097, 2.0
  %v1099 = vsub.f32 %v1098, 1.0
  %v1100 = vmul.f32 %v1097, 0.0
  %1102 = vrot.lane.b32.xlu0 %v1099, 64
  %v1103 = vpop.permute.xlu0 %1102
  %v1105 = vmul.f32 %v1097, %v1103
  %1107 = vrot.lane.b32.xlu0 %v1105, 32
  %v1108 = vpop.permute.xlu0 %1107
  %v1110 = vadd.f32 %v1100, %v1108
  %v1111 = vtanh.pop %v1110
  %1113 = vrot.lane.b32.xlu0 %v1111, 64
  %v1114 = vpop.permute.xlu0 %1113
  %v1116 = vmul.f32 %v1097, %v1114
  %1118 = vrot.lane.b32.xlu0 %v1116, 32
  %v1119 = vpop.permute.xlu0 %1118
  %1121 = vst.msk [vmem:[#allocation2] sm:$0x1] %vm202, %v1119
  %v1122 = vld [vmem:[#allocation3 + $0x1] sm:$0x1]
  %v1123 = vsel %vm98, %v1119, 0
  %1125 = vmatprep.subr.mxu0 0.0
  %1126 = vmatpush1.msra.mxu0 %v937
  %1127 = vmatprep.subr.mxu0 0.0
  %1128 = vmatpush1.msra.mxu0 %v938
  %1129 = vmatprep.subr.mxu0 0.0
  %1130 = vmatpush1.msra.mxu0 %v939
  %1131 = vmatprep.subr.mxu0 0.0
  %1132 = vmatpush1.msra.mxu0 %v940
  %1133 = vmatprep.subr.mxu0 0.0
  %1134 = vmatpush1.msra.mxu0 0.0
  %1135 = vmatprep.subr.mxu0 0.0
  %1136 = vmatpush1.msra.mxu0 0.0
  %1137 = vmatprep.subr.mxu0 0.0
  %1138 = vmatpush1.msra.mxu0 0.0
  %1139 = vmatprep.subr.mxu0 0.0
  %1140 = vmatpush1.msra.mxu0 0.0
  %1141 = vmatprep.subr.mxu0 0.0
  %1142 = vmatpush1.msra.mxu0 0.0
  %1143 = vmatprep.subr.mxu0 0.0
  %1144 = vmatpush1.msra.mxu0 0.0
  %1145 = vmatprep.subr.mxu0 0.0
  %1146 = vmatpush1.msra.mxu0 0.0
  %1147 = vmatprep.subr.mxu0 0.0
  %1148 = vmatpush1.msra.mxu0 0.0
  %1149 = vmatprep.subr.mxu0 0.0
  %1150 = vmatpush1.msra.mxu0 0.0
  %1151 = vmatprep.subr.mxu0 0.0
  %1152 = vmatpush1.msra.mxu0 0.0
  %1153 = vmatprep.subr.mxu0 0.0
  %1154 = vmatpush1.msra.mxu0 0.0
  %1155 = vmatprep.subr.mxu0 0.0
  %1156 = vmatpush1.msra.mxu0 0.0
  %1157 = vmatprep.subr.mxu0 0.0
  %1158 = vmatpush1.msra.mxu0 0.0
  %1159 = vmatprep.subr.mxu0 0.0
  %1160 = vmatpush1.msra.mxu0 0.0
  %1161 = vmatprep.subr.mxu0 0.0
  %1162 = vmatpush1.msra.mxu0 0.0
  %1163 = vmatprep.subr.mxu0 0.0
  %1164 = vmatpush1.msra.mxu0 0.0
  %1165 = vmatprep.subr.mxu0 0.0
  %1166 = vmatpush1.msra.mxu0 0.0
  %1167 = vmatprep.subr.mxu0 0.0
  %1168 = vmatpush1.msra.mxu0 0.0
  %1169 = vmatprep.subr.mxu0 0.0
  %1170 = vmatpush1.msra.mxu0 0.0
  %1171 = vmatprep.subr.mxu0 0.0
  %1172 = vmatpush1.msra.mxu0 0.0
  %1173 = vmatprep.subr.mxu0 0.0
  %1174 = vmatpush1.msra.mxu0 0.0
  %1175 = vmatprep.subr.mxu0 0.0
  %1176 = vmatpush1.msra.mxu0 0.0
  %1177 = vmatprep.subr.mxu0 0.0
  %1178 = vmatpush1.msra.mxu0 0.0
  %1179 = vmatprep.subr.mxu0 0.0
  %1180 = vmatpush1.msra.mxu0 0.0
  %1181 = vmatprep.subr.mxu0 0.0
  %1182 = vmatpush1.msra.mxu0 0.0
  %1183 = vmatprep.subr.mxu0 0.0
  %1184 = vmatpush1.msra.mxu0 0.0
  %1185 = vmatprep.subr.mxu0 0.0
  %1186 = vmatpush1.msra.mxu0 0.0
  %1187 = vmatprep.subr.mxu0 0.0
  %1188 = vmatpush1.msra.mxu0 0.0
  %1189 = vmatprep.mubr.f32.mxu0 0.0
  %1190 = vmatmul.mubr.f32.gmra.mrb[0].mxu0 %v1123
  %v1191 = vpop.f32.mrb[0].mxu0
  %v1192 = vadd.f32 0.0, %v1191
  %v1193 = vpop.f32.mrb[0].mxu0
  %1194 = vdwg.mxu0
  %v1195 = vadd.f32 %v1122, %v1192
  %v1196 = vxor.u32 %v1195, 2147483648
  %v1197 = vmul.f32 %v1196, 1.442695
  %v1198 = vpow.pop %v1197
  %v1199 = vadd.f32 %v1198, 1.0
  %v1200 = vrcp.pop %v1199
  %v1201 = vmul.f32 1.0, %v1200
  %v1202 = vmul.f32 %v1201, 2.0
  %v1203 = vsub.f32 %v1202, 1.0
  %v1204 = vmul.f32 %v1201, %v1110
  %1206 = vrot.lane.b32.xlu0 %v1203, 64
  %v1207 = vpop.permute.xlu0 %1206
  %v1209 = vmul.f32 %v1201, %v1207
  %1211 = vrot.lane.b32.xlu0 %v1209, 32
  %v1212 = vpop.permute.xlu0 %1211
  %v1214 = vadd.f32 %v1204, %v1212
  %v1215 = vtanh.pop %v1214
  %1217 = vrot.lane.b32.xlu0 %v1215, 64
  %v1218 = vpop.permute.xlu0 %1217
  %v1220 = vmul.f32 %v1201, %v1218
  %1222 = vrot.lane.b32.xlu0 %v1220, 32
  %v1223 = vpop.permute.xlu0 %1222
  %1225 = vst.msk [vmem:[#allocation2 + $0x1] sm:$0x1] %vm202, %v1223
  %v1226 = vld [vmem:[#allocation3 + $0x2] sm:$0x1]
  %v1227 = vsel %vm98, %v1223, 0
  %1229 = vmatprep.subr.mxu0 0.0
  %1230 = vmatpush1.msra.mxu0 %v937
  %1231 = vmatprep.subr.mxu0 0.0
  %1232 = vmatpush1.msra.mxu0 %v938
  %1233 = vmatprep.subr.mxu0 0.0
  %1234 = vmatpush1.msra.mxu0 %v939
  %1235 = vmatprep.subr.mxu0 0.0
  %1236 = vmatpush1.msra.mxu0 %v940
  %1237 = vmatprep.subr.mxu0 0.0
  %1238 = vmatpush1.msra.mxu0 0.0
  %1239 = vmatprep.subr.mxu0 0.0
  %1240 = vmatpush1.msra.mxu0 0.0
  %1241 = vmatprep.subr.mxu0 0.0
  %1242 = vmatpush1.msra.mxu0 0.0
  %1243 = vmatprep.subr.mxu0 0.0
  %1244 = vmatpush1.msra.mxu0 0.0
  %1245 = vmatprep.subr.mxu0 0.0
  %1246 = vmatpush1.msra.mxu0 0.0
  %1247 = vmatprep.subr.mxu0 0.0
  %1248 = vmatpush1.msra.mxu0 0.0
  %1249 = vmatprep.subr.mxu0 0.0
  %1250 = vmatpush1.msra.mxu0 0.0
  %1251 = vmatprep.subr.mxu0 0.0
  %1252 = vmatpush1.msra.mxu0 0.0
  %1253 = vmatprep.subr.mxu0 0.0
  %1254 = vmatpush1.msra.mxu0 0.0
  %1255 = vmatprep.subr.mxu0 0.0
  %1256 = vmatpush1.msra.mxu0 0.0
  %1257 = vmatprep.subr.mxu0 0.0
  %1258 = vmatpush1.msra.mxu0 0.0
  %1259 = vmatprep.subr.mxu0 0.0
  %1260 = vmatpush1.msra.mxu0 0.0
  %1261 = vmatprep.subr.mxu0 0.0
  %1262 = vmatpush1.msra.mxu0 0.0
  %1263 = vmatprep.subr.mxu0 0.0
  %1264 = vmatpush1.msra.mxu0 0.0
  %1265 = vmatprep.subr.mxu0 0.0
  %1266 = vmatpush1.msra.mxu0 0.0
  %1267 = vmatprep.subr.mxu0 0.0
  %1268 = vmatpush1.msra.mxu0 0.0
  %1269 = vmatprep.subr.mxu0 0.0
  %1270 = vmatpush1.msra.mxu0 0.0
  %1271 = vmatprep.subr.mxu0 0.0
  %1272 = vmatpush1.msra.mxu0 0.0
  %1273 = vmatprep.subr.mxu0 0.0
  %1274 = vmatpush1.msra.mxu0 0.0
  %1275 = vmatprep.subr.mxu0 0.0
  %1276 = vmatpush1.msra.mxu0 0.0
  %1277 = vmatprep.subr.mxu0 0.0
  %1278 = vmatpush1.msra.mxu0 0.0
  %1279 = vmatprep.subr.mxu0 0.0
  %1280 = vmatpush1.msra.mxu0 0.0
  %1281 = vmatprep.subr.mxu0 0.0
  %1282 = vmatpush1.msra.mxu0 0.0
  %1283 = vmatprep.subr.mxu0 0.0
  %1284 = vmatpush1.msra.mxu0 0.0
  %1285 = vmatprep.subr.mxu0 0.0
  %1286 = vmatpush1.msra.mxu0 0.0
  %1287 = vmatprep.subr.mxu0 0.0
  %1288 = vmatpush1.msra.mxu0 0.0
  %1289 = vmatprep.subr.mxu0 0.0
  %1290 = vmatpush1.msra.mxu0 0.0
  %1291 = vmatprep.subr.mxu0 0.0
  %1292 = vmatpush1.msra.mxu0 0.0
  %1293 = vmatprep.mubr.f32.mxu0 0.0
  %1294 = vmatmul.mubr.f32.gmra.mrb[0].mxu0 %v1227
  %v1295 = vpop.f32.mrb[0].mxu0
  %v1296 = vadd.f32 0.0, %v1295
  %v1297 = vpop.f32.mrb[0].mxu0
  %1298 = vdwg.mxu0
  %v1299 = vadd.f32 %v1226, %v1296
  %v1300 = vxor.u32 %v1299, 2147483648
  %v1301 = vmul.f32 %v1300, 1.442695
  %v1302 = vpow.pop %v1301
  %v1303 = vadd.f32 %v1302, 1.0
  %v1304 = vrcp.pop %v1303
  %v1305 = vmul.f32 1.0, %v1304
  %v1306 = vmul.f32 %v1305, 2.0
  %v1307 = vsub.f32 %v1306, 1.0
  %v1308 = vmul.f32 %v1305, %v1214
  %1310 = vrot.lane.b32.xlu0 %v1307, 64
  %v1311 = vpop.permute.xlu0 %1310
  %v1313 = vmul.f32 %v1305, %v1311
  %1315 = vrot.lane.b32.xlu0 %v1313, 32
  %v1316 = vpop.permute.xlu0 %1315
  %v1318 = vadd.f32 %v1308, %v1316
  %v1319 = vtanh.pop %v1318
  %1321 = vrot.lane.b32.xlu0 %v1319, 64
  %v1322 = vpop.permute.xlu0 %1321
  %v1324 = vmul.f32 %v1305, %v1322
  %1326 = vrot.lane.b32.xlu0 %v1324, 32
  %v1327 = vpop.permute.xlu0 %1326
  %1329 = vst.msk [vmem:[#allocation2 + $0x2] sm:$0x1] %vm202, %v1327
  %v1330 = vld [vmem:[#allocation3 + $0x3] sm:$0x1]
  %v1331 = vsel %vm98, %v1327, 0
  %1333 = vmatprep.subr.mxu0 0.0
  %1334 = vmatpush1.msra.mxu0 %v937
  %1335 = vmatprep.subr.mxu0 0.0
  %1336 = vmatpush1.msra.mxu0 %v938
  %1337 = vmatprep.subr.mxu0 0.0
  %1338 = vmatpush1.msra.mxu0 %v939
  %1339 = vmatprep.subr.mxu0 0.0
  %1340 = vmatpush1.msra.mxu0 %v940
  %1341 = vmatprep.subr.mxu0 0.0
  %1342 = vmatpush1.msra.mxu0 0.0
  %1343 = vmatprep.subr.mxu0 0.0
  %1344 = vmatpush1.msra.mxu0 0.0
  %1345 = vmatprep.subr.mxu0 0.0
  %1346 = vmatpush1.msra.mxu0 0.0
  %1347 = vmatprep.subr.mxu0 0.0
  %1348 = vmatpush1.msra.mxu0 0.0
  %1349 = vmatprep.subr.mxu0 0.0
  %1350 = vmatpush1.msra.mxu0 0.0
  %1351 = vmatprep.subr.mxu0 0.0
  %1352 = vmatpush1.msra.mxu0 0.0
  %1353 = vmatprep.subr.mxu0 0.0
  %1354 = vmatpush1.msra.mxu0 0.0
  %1355 = vmatprep.subr.mxu0 0.0
  %1356 = vmatpush1.msra.mxu0 0.0
  %1357 = vmatprep.subr.mxu0 0.0
  %1358 = vmatpush1.msra.mxu0 0.0
  %1359 = vmatprep.subr.mxu0 0.0
  %1360 = vmatpush1.msra.mxu0 0.0
  %1361 = vmatprep.subr.mxu0 0.0
  %1362 = vmatpush1.msra.mxu0 0.0
  %1363 = vmatprep.subr.mxu0 0.0
  %1364 = vmatpush1.msra.mxu0 0.0
  %1365 = vmatprep.subr.mxu0 0.0
  %1366 = vmatpush1.msra.mxu0 0.0
  %1367 = vmatprep.subr.mxu0 0.0
  %1368 = vmatpush1.msra.mxu0 0.0
  %1369 = vmatprep.subr.mxu0 0.0
  %1370 = vmatpush1.msra.mxu0 0.0
  %1371 = vmatprep.subr.mxu0 0.0
  %1372 = vmatpush1.msra.mxu0 0.0
  %1373 = vmatprep.subr.mxu0 0.0
  %1374 = vmatpush1.msra.mxu0 0.0
  %1375 = vmatprep.subr.mxu0 0.0
  %1376 = vmatpush1.msra.mxu0 0.0
  %1377 = vmatprep.subr.mxu0 0.0
  %1378 = vmatpush1.msra.mxu0 0.0
  %1379 = vmatprep.subr.mxu0 0.0
  %1380 = vmatpush1.msra.mxu0 0.0
  %1381 = vmatprep.subr.mxu0 0.0
  %1382 = vmatpush1.msra.mxu0 0.0
  %1383 = vmatprep.subr.mxu0 0.0
  %1384 = vmatpush1.msra.mxu0 0.0
  %1385 = vmatprep.subr.mxu0 0.0
  %1386 = vmatpush1.msra.mxu0 0.0
  %1387 = vmatprep.subr.mxu0 0.0
  %1388 = vmatpush1.msra.mxu0 0.0
  %1389 = vmatprep.subr.mxu0 0.0
  %1390 = vmatpush1.msra.mxu0 0.0
  %1391 = vmatprep.subr.mxu0 0.0
  %1392 = vmatpush1.msra.mxu0 0.0
  %1393 = vmatprep.subr.mxu0 0.0
  %1394 = vmatpush1.msra.mxu0 0.0
  %1395 = vmatprep.subr.mxu0 0.0
  %1396 = vmatpush1.msra.mxu0 0.0
  %1397 = vmatprep.mubr.f32.mxu0 0.0
  %1398 = vmatmul.mubr.f32.gmra.mrb[0].mxu0 %v1331
  %v1399 = vpop.f32.mrb[0].mxu0
  %v1400 = vadd.f32 0.0, %v1399
  %v1401 = vpop.f32.mrb[0].mxu0
  %1402 = vdwg.mxu0
  %v1403 = vadd.f32 %v1330, %v1400
  %v1404 = vxor.u32 %v1403, 2147483648
  %v1405 = vmul.f32 %v1404, 1.442695
  %v1406 = vpow.pop %v1405
  %v1407 = vadd.f32 %v1406, 1.0
  %v1408 = vrcp.pop %v1407
  %v1409 = vmul.f32 1.0, %v1408
  %v1410 = vmul.f32 %v1409, 2.0
  %v1411 = vsub.f32 %v1410, 1.0
  %v1412 = vmul.f32 %v1409, %v1318
  %1414 = vrot.lane.b32.xlu0 %v1411, 64
  %v1415 = vpop.permute.xlu0 %1414
  %v1417 = vmul.f32 %v1409, %v1415
  %1419 = vrot.lane.b32.xlu0 %v1417, 32
  %v1420 = vpop.permute.xlu0 %1419
  %v1422 = vadd.f32 %v1412, %v1420
  %v1423 = vtanh.pop %v1422
  %1425 = vrot.lane.b32.xlu0 %v1423, 64
  %v1426 = vpop.permute.xlu0 %1425
  %v1428 = vmul.f32 %v1409, %v1426
  %1430 = vrot.lane.b32.xlu0 %v1428, 32
  %v1431 = vpop.permute.xlu0 %1430
  %1433 = vst.msk [vmem:[#allocation2 + $0x3] sm:$0x1] %vm202, %v1431
  %v1434 = vld [vmem:[#allocation3 + $0x4] sm:$0x1]
  %v1435 = vsel %vm98, %v1431, 0
  %1437 = vmatprep.subr.mxu0 0.0
  %1438 = vmatpush1.msra.mxu0 %v937
  %1439 = vmatprep.subr.mxu0 0.0
  %1440 = vmatpush1.msra.mxu0 %v938
  %1441 = vmatprep.subr.mxu0 0.0
  %1442 = vmatpush1.msra.mxu0 %v939
  %1443 = vmatprep.subr.mxu0 0.0
  %1444 = vmatpush1.msra.mxu0 %v940
  %1445 = vmatprep.subr.mxu0 0.0
  %1446 = vmatpush1.msra.mxu0 0.0
  %1447 = vmatprep.subr.mxu0 0.0
  %1448 = vmatpush1.msra.mxu0 0.0
  %1449 = vmatprep.subr.mxu0 0.0
  %1450 = vmatpush1.msra.mxu0 0.0
  %1451 = vmatprep.subr.mxu0 0.0
  %1452 = vmatpush1.msra.mxu0 0.0
  %1453 = vmatprep.subr.mxu0 0.0
  %1454 = vmatpush1.msra.mxu0 0.0
  %1455 = vmatprep.subr.mxu0 0.0
  %1456 = vmatpush1.msra.mxu0 0.0
  %1457 = vmatprep.subr.mxu0 0.0
  %1458 = vmatpush1.msra.mxu0 0.0
  %1459 = vmatprep.subr.mxu0 0.0
  %1460 = vmatpush1.msra.mxu0 0.0
  %1461 = vmatprep.subr.mxu0 0.0
  %1462 = vmatpush1.msra.mxu0 0.0
  %1463 = vmatprep.subr.mxu0 0.0
  %1464 = vmatpush1.msra.mxu0 0.0
  %1465 = vmatprep.subr.mxu0 0.0
  %1466 = vmatpush1.msra.mxu0 0.0
  %1467 = vmatprep.subr.mxu0 0.0
  %1468 = vmatpush1.msra.mxu0 0.0
  %1469 = vmatprep.subr.mxu0 0.0
  %1470 = vmatpush1.msra.mxu0 0.0
  %1471 = vmatprep.subr.mxu0 0.0
  %1472 = vmatpush1.msra.mxu0 0.0
  %1473 = vmatprep.subr.mxu0 0.0
  %1474 = vmatpush1.msra.mxu0 0.0
  %1475 = vmatprep.subr.mxu0 0.0
  %1476 = vmatpush1.msra.mxu0 0.0
  %1477 = vmatprep.subr.mxu0 0.0
  %1478 = vmatpush1.msra.mxu0 0.0
  %1479 = vmatprep.subr.mxu0 0.0
  %1480 = vmatpush1.msra.mxu0 0.0
  %1481 = vmatprep.subr.mxu0 0.0
  %1482 = vmatpush1.msra.mxu0 0.0
  %1483 = vmatprep.subr.mxu0 0.0
  %1484 = vmatpush1.msra.mxu0 0.0
  %1485 = vmatprep.subr.mxu0 0.0
  %1486 = vmatpush1.msra.mxu0 0.0
  %1487 = vmatprep.subr.mxu0 0.0
  %1488 = vmatpush1.msra.mxu0 0.0
  %1489 = vmatprep.subr.mxu0 0.0
  %1490 = vmatpush1.msra.mxu0 0.0
  %1491 = vmatprep.subr.mxu0 0.0
  %1492 = vmatpush1.msra.mxu0 0.0
  %1493 = vmatprep.subr.mxu0 0.0
  %1494 = vmatpush1.msra.mxu0 0.0
  %1495 = vmatprep.subr.mxu0 0.0
  %1496 = vmatpush1.msra.mxu0 0.0
  %1497 = vmatprep.subr.mxu0 0.0
  %1498 = vmatpush1.msra.mxu0 0.0
  %1499 = vmatprep.subr.mxu0 0.0
  %1500 = vmatpush1.msra.mxu0 0.0
  %1501 = vmatprep.mubr.f32.mxu0 0.0
  %1502 = vmatmul.mubr.f32.gmra.mrb[0].mxu0 %v1435
  %v1503 = vpop.f32.mrb[0].mxu0
  %v1504 = vadd.f32 0.0, %v1503
  %v1505 = vpop.f32.mrb[0].mxu0
  %1506 = vdwg.mxu0
  %v1507 = vadd.f32 %v1434, %v1504
  %v1508 = vxor.u32 %v1507, 2147483648
  %v1509 = vmul.f32 %v1508, 1.442695
  %v1510 = vpow.pop %v1509
  %v1511 = vadd.f32 %v1510, 1.0
  %v1512 = vrcp.pop %v1511
  %v1513 = vmul.f32 1.0, %v1512
  %v1514 = vmul.f32 %v1513, 2.0
  %v1515 = vsub.f32 %v1514, 1.0
  %v1516 = vmul.f32 %v1513, %v1422
  %1518 = vrot.lane.b32.xlu0 %v1515, 64
  %v1519 = vpop.permute.xlu0 %1518
  %v1521 = vmul.f32 %v1513, %v1519
  %1523 = vrot.lane.b32.xlu0 %v1521, 32
  %v1524 = vpop.permute.xlu0 %1523
  %v1526 = vadd.f32 %v1516, %v1524
  %v1527 = vtanh.pop %v1526
  %1529 = vrot.lane.b32.xlu0 %v1527, 64
  %v1530 = vpop.permute.xlu0 %1529
  %v1532 = vmul.f32 %v1513, %v1530
  %1534 = vrot.lane.b32.xlu0 %v1532, 32
  %v1535 = vpop.permute.xlu0 %1534
  %1537 = vst.msk [vmem:[#allocation2 + $0x4] sm:$0x1] %vm202, %v1535
  %v1538 = vld [vmem:[#allocation3 + $0x5] sm:$0x1]
  %v1539 = vsel %vm98, %v1535, 0
  %1541 = vmatprep.subr.mxu0 0.0
  %1542 = vmatpush1.msra.mxu0 %v937
  %1543 = vmatprep.subr.mxu0 0.0
  %1544 = vmatpush1.msra.mxu0 %v938
  %1545 = vmatprep.subr.mxu0 0.0
  %1546 = vmatpush1.msra.mxu0 %v939
  %1547 = vmatprep.subr.mxu0 0.0
  %1548 = vmatpush1.msra.mxu0 %v940
  %1549 = vmatprep.subr.mxu0 0.0
  %1550 = vmatpush1.msra.mxu0 0.0
  %1551 = vmatprep.subr.mxu0 0.0
  %1552 = vmatpush1.msra.mxu0 0.0
  %1553 = vmatprep.subr.mxu0 0.0
  %1554 = vmatpush1.msra.mxu0 0.0
  %1555 = vmatprep.subr.mxu0 0.0
  %1556 = vmatpush1.msra.mxu0 0.0
  %1557 = vmatprep.subr.mxu0 0.0
  %1558 = vmatpush1.msra.mxu0 0.0
  %1559 = vmatprep.subr.mxu0 0.0
  %1560 = vmatpush1.msra.mxu0 0.0
  %1561 = vmatprep.subr.mxu0 0.0
  %1562 = vmatpush1.msra.mxu0 0.0
  %1563 = vmatprep.subr.mxu0 0.0
  %1564 = vmatpush1.msra.mxu0 0.0
  %1565 = vmatprep.subr.mxu0 0.0
  %1566 = vmatpush1.msra.mxu0 0.0
  %1567 = vmatprep.subr.mxu0 0.0
  %1568 = vmatpush1.msra.mxu0 0.0
  %1569 = vmatprep.subr.mxu0 0.0
  %1570 = vmatpush1.msra.mxu0 0.0
  %1571 = vmatprep.subr.mxu0 0.0
  %1572 = vmatpush1.msra.mxu0 0.0
  %1573 = vmatprep.subr.mxu0 0.0
  %1574 = vmatpush1.msra.mxu0 0.0
  %1575 = vmatprep.subr.mxu0 0.0
  %1576 = vmatpush1.msra.mxu0 0.0
  %1577 = vmatprep.subr.mxu0 0.0
  %1578 = vmatpush1.msra.mxu0 0.0
  %1579 = vmatprep.subr.mxu0 0.0
  %1580 = vmatpush1.msra.mxu0 0.0
  %1581 = vmatprep.subr.mxu0 0.0
  %1582 = vmatpush1.msra.mxu0 0.0
  %1583 = vmatprep.subr.mxu0 0.0
  %1584 = vmatpush1.msra.mxu0 0.0
  %1585 = vmatprep.subr.mxu0 0.0
  %1586 = vmatpush1.msra.mxu0 0.0
  %1587 = vmatprep.subr.mxu0 0.0
  %1588 = vmatpush1.msra.mxu0 0.0
  %1589 = vmatprep.subr.mxu0 0.0
  %1590 = vmatpush1.msra.mxu0 0.0
  %1591 = vmatprep.subr.mxu0 0.0
  %1592 = vmatpush1.msra.mxu0 0.0
  %1593 = vmatprep.subr.mxu0 0.0
  %1594 = vmatpush1.msra.mxu0 0.0
  %1595 = vmatprep.subr.mxu0 0.0
  %1596 = vmatpush1.msra.mxu0 0.0
  %1597 = vmatprep.subr.mxu0 0.0
  %1598 = vmatpush1.msra.mxu0 0.0
  %1599 = vmatprep.subr.mxu0 0.0
  %1600 = vmatpush1.msra.mxu0 0.0
  %1601 = vmatprep.subr.mxu0 0.0
  %1602 = vmatpush1.msra.mxu0 0.0
  %1603 = vmatprep.subr.mxu0 0.0
  %1604 = vmatpush1.msra.mxu0 0.0
  %1605 = vmatprep.mubr.f32.mxu0 0.0
  %1606 = vmatmul.mubr.f32.gmra.mrb[0].mxu0 %v1539
  %v1607 = vpop.f32.mrb[0].mxu0
  %v1608 = vadd.f32 0.0, %v1607
  %v1609 = vpop.f32.mrb[0].mxu0
  %1610 = vdwg.mxu0
  %v1611 = vadd.f32 %v1538, %v1608
  %v1612 = vxor.u32 %v1611, 2147483648
  %v1613 = vmul.f32 %v1612, 1.442695
  %v1614 = vpow.pop %v1613
  %v1615 = vadd.f32 %v1614, 1.0
  %v1616 = vrcp.pop %v1615
  %v1617 = vmul.f32 1.0, %v1616
  %v1618 = vmul.f32 %v1617, 2.0
  %v1619 = vsub.f32 %v1618, 1.0
  %v1620 = vmul.f32 %v1617, %v1526
  %1622 = vrot.lane.b32.xlu0 %v1619, 64
  %v1623 = vpop.permute.xlu0 %1622
  %v1625 = vmul.f32 %v1617, %v1623
  %1627 = vrot.lane.b32.xlu0 %v1625, 32
  %v1628 = vpop.permute.xlu0 %1627
  %v1630 = vadd.f32 %v1620, %v1628
  %v1631 = vtanh.pop %v1630
  %1633 = vrot.lane.b32.xlu0 %v1631, 64
  %v1634 = vpop.permute.xlu0 %1633
  %v1636 = vmul.f32 %v1617, %v1634
  %1638 = vrot.lane.b32.xlu0 %v1636, 32
  %v1639 = vpop.permute.xlu0 %1638
  %1641 = vst.msk [vmem:[#allocation2 + $0x5] sm:$0x1] %vm202, %v1639
  %v1642 = vld [vmem:[#allocation3 + $0x6] sm:$0x1]
  %v1643 = vsel %vm98, %v1639, 0
  %1645 = vmatprep.subr.mxu0 0.0
  %1646 = vmatpush1.msra.mxu0 %v937
  %1647 = vmatprep.subr.mxu0 0.0
  %1648 = vmatpush1.msra.mxu0 %v938
  %1649 = vmatprep.subr.mxu0 0.0
  %1650 = vmatpush1.msra.mxu0 %v939
  %1651 = vmatprep.subr.mxu0 0.0
  %1652 = vmatpush1.msra.mxu0 %v940
  %1653 = vmatprep.subr.mxu0 0.0
  %1654 = vmatpush1.msra.mxu0 0.0
  %1655 = vmatprep.subr.mxu0 0.0
  %1656 = vmatpush1.msra.mxu0 0.0
  %1657 = vmatprep.subr.mxu0 0.0
  %1658 = vmatpush1.msra.mxu0 0.0
  %1659 = vmatprep.subr.mxu0 0.0
  %1660 = vmatpush1.msra.mxu0 0.0
  %1661 = vmatprep.subr.mxu0 0.0
  %1662 = vmatpush1.msra.mxu0 0.0
  %1663 = vmatprep.subr.mxu0 0.0
  %1664 = vmatpush1.msra.mxu0 0.0
  %1665 = vmatprep.subr.mxu0 0.0
  %1666 = vmatpush1.msra.mxu0 0.0
  %1667 = vmatprep.subr.mxu0 0.0
  %1668 = vmatpush1.msra.mxu0 0.0
  %1669 = vmatprep.subr.mxu0 0.0
  %1670 = vmatpush1.msra.mxu0 0.0
  %1671 = vmatprep.subr.mxu0 0.0
  %1672 = vmatpush1.msra.mxu0 0.0
  %1673 = vmatprep.subr.mxu0 0.0
  %1674 = vmatpush1.msra.mxu0 0.0
  %1675 = vmatprep.subr.mxu0 0.0
  %1676 = vmatpush1.msra.mxu0 0.0
  %1677 = vmatprep.subr.mxu0 0.0
  %1678 = vmatpush1.msra.mxu0 0.0
  %1679 = vmatprep.subr.mxu0 0.0
  %1680 = vmatpush1.msra.mxu0 0.0
  %1681 = vmatprep.subr.mxu0 0.0
  %1682 = vmatpush1.msra.mxu0 0.0
  %1683 = vmatprep.subr.mxu0 0.0
  %1684 = vmatpush1.msra.mxu0 0.0
  %1685 = vmatprep.subr.mxu0 0.0
  %1686 = vmatpush1.msra.mxu0 0.0
  %1687 = vmatprep.subr.mxu0 0.0
  %1688 = vmatpush1.msra.mxu0 0.0
  %1689 = vmatprep.subr.mxu0 0.0
  %1690 = vmatpush1.msra.mxu0 0.0
  %1691 = vmatprep.subr.mxu0 0.0
  %1692 = vmatpush1.msra.mxu0 0.0
  %1693 = vmatprep.subr.mxu0 0.0
  %1694 = vmatpush1.msra.mxu0 0.0
  %1695 = vmatprep.subr.mxu0 0.0
  %1696 = vmatpush1.msra.mxu0 0.0
  %1697 = vmatprep.subr.mxu0 0.0
  %1698 = vmatpush1.msra.mxu0 0.0
  %1699 = vmatprep.subr.mxu0 0.0
  %1700 = vmatpush1.msra.mxu0 0.0
  %1701 = vmatprep.subr.mxu0 0.0
  %1702 = vmatpush1.msra.mxu0 0.0
  %1703 = vmatprep.subr.mxu0 0.0
  %1704 = vmatpush1.msra.mxu0 0.0
  %1705 = vmatprep.subr.mxu0 0.0
  %1706 = vmatpush1.msra.mxu0 0.0
  %1707 = vmatprep.subr.mxu0 0.0
  %1708 = vmatpush1.msra.mxu0 0.0
  %1709 = vmatprep.mubr.f32.mxu0 0.0
  %1710 = vmatmul.mubr.f32.gmra.mrb[0].mxu0 %v1643
  %v1711 = vpop.f32.mrb[0].mxu0
  %v1712 = vadd.f32 0.0, %v1711
  %v1713 = vpop.f32.mrb[0].mxu0
  %1714 = vdwg.mxu0
  %v1715 = vadd.f32 %v1642, %v1712
  %v1716 = vxor.u32 %v1715, 2147483648
  %v1717 = vmul.f32 %v1716, 1.442695
  %v1718 = vpow.pop %v1717
  %v1719 = vadd.f32 %v1718, 1.0
  %v1720 = vrcp.pop %v1719
  %v1721 = vmul.f32 1.0, %v1720
  %v1722 = vmul.f32 %v1721, 2.0
  %v1723 = vsub.f32 %v1722, 1.0
  %v1724 = vmul.f32 %v1721, %v1630
  %1726 = vrot.lane.b32.xlu0 %v1723, 64
  %v1727 = vpop.permute.xlu0 %1726
  %v1729 = vmul.f32 %v1721, %v1727
  %1731 = vrot.lane.b32.xlu0 %v1729, 32
  %v1732 = vpop.permute.xlu0 %1731
  %v1734 = vadd.f32 %v1724, %v1732
  %v1735 = vtanh.pop %v1734
  %1737 = vrot.lane.b32.xlu0 %v1735, 64
  %v1738 = vpop.permute.xlu0 %1737
  %v1740 = vmul.f32 %v1721, %v1738
  %1742 = vrot.lane.b32.xlu0 %v1740, 32
  %v1743 = vpop.permute.xlu0 %1742
  %1745 = vst.msk [vmem:[#allocation2 + $0x6] sm:$0x1] %vm202, %v1743
  %v1746 = vld [vmem:[#allocation3 + $0x7] sm:$0x1]
  %v1747 = vsel %vm98, %v1743, 0
  %1749 = vmatprep.subr.mxu0 0.0
  %1750 = vmatpush1.msra.mxu0 %v937
  %1751 = vmatprep.subr.mxu0 0.0
  %1752 = vmatpush1.msra.mxu0 %v938
  %1753 = vmatprep.subr.mxu0 0.0
  %1754 = vmatpush1.msra.mxu0 %v939
  %1755 = vmatprep.subr.mxu0 0.0
  %1756 = vmatpush1.msra.mxu0 %v940
  %1757 = vmatprep.subr.mxu0 0.0
  %1758 = vmatpush1.msra.mxu0 0.0
  %1759 = vmatprep.subr.mxu0 0.0
  %1760 = vmatpush1.msra.mxu0 0.0
  %1761 = vmatprep.subr.mxu0 0.0
  %1762 = vmatpush1.msra.mxu0 0.0
  %1763 = vmatprep.subr.mxu0 0.0
  %1764 = vmatpush1.msra.mxu0 0.0
  %1765 = vmatprep.subr.mxu0 0.0
  %1766 = vmatpush1.msra.mxu0 0.0
  %1767 = vmatprep.subr.mxu0 0.0
  %1768 = vmatpush1.msra.mxu0 0.0
  %1769 = vmatprep.subr.mxu0 0.0
  %1770 = vmatpush1.msra.mxu0 0.0
  %1771 = vmatprep.subr.mxu0 0.0
  %1772 = vmatpush1.msra.mxu0 0.0
  %1773 = vmatprep.subr.mxu0 0.0
  %1774 = vmatpush1.msra.mxu0 0.0
  %1775 = vmatprep.subr.mxu0 0.0
  %1776 = vmatpush1.msra.mxu0 0.0
  %1777 = vmatprep.subr.mxu0 0.0
  %1778 = vmatpush1.msra.mxu0 0.0
  %1779 = vmatprep.subr.mxu0 0.0
  %1780 = vmatpush1.msra.mxu0 0.0
  %1781 = vmatprep.subr.mxu0 0.0
  %1782 = vmatpush1.msra.mxu0 0.0
  %1783 = vmatprep.subr.mxu0 0.0
  %1784 = vmatpush1.msra.mxu0 0.0
  %1785 = vmatprep.subr.mxu0 0.0
  %1786 = vmatpush1.msra.mxu0 0.0
  %1787 = vmatprep.subr.mxu0 0.0
  %1788 = vmatpush1.msra.mxu0 0.0
  %1789 = vmatprep.subr.mxu0 0.0
  %1790 = vmatpush1.msra.mxu0 0.0
  %1791 = vmatprep.subr.mxu0 0.0
  %1792 = vmatpush1.msra.mxu0 0.0
  %1793 = vmatprep.subr.mxu0 0.0
  %1794 = vmatpush1.msra.mxu0 0.0
  %1795 = vmatprep.subr.mxu0 0.0
  %1796 = vmatpush1.msra.mxu0 0.0
  %1797 = vmatprep.subr.mxu0 0.0
  %1798 = vmatpush1.msra.mxu0 0.0
  %1799 = vmatprep.subr.mxu0 0.0
  %1800 = vmatpush1.msra.mxu0 0.0
  %1801 = vmatprep.subr.mxu0 0.0
  %1802 = vmatpush1.msra.mxu0 0.0
  %1803 = vmatprep.subr.mxu0 0.0
  %1804 = vmatpush1.msra.mxu0 0.0
  %1805 = vmatprep.subr.mxu0 0.0
  %1806 = vmatpush1.msra.mxu0 0.0
  %1807 = vmatprep.subr.mxu0 0.0
  %1808 = vmatpush1.msra.mxu0 0.0
  %1809 = vmatprep.subr.mxu0 0.0
  %1810 = vmatpush1.msra.mxu0 0.0
  %1811 = vmatprep.subr.mxu0 0.0
  %1812 = vmatpush1.msra.mxu0 0.0
  %1813 = vmatprep.mubr.f32.mxu0 0.0
  %1814 = vmatmul.mubr.f32.gmra.mrb[0].mxu0 %v1747
  %v1815 = vpop.f32.mrb[0].mxu0
  %v1816 = vadd.f32 0.0, %v1815
  %v1817 = vpop.f32.mrb[0].mxu0
  %1818 = vdwg.mxu0
  %v1819 = vadd.f32 %v1746, %v1816
  %v1820 = vxor.u32 %v1819, 2147483648
  %v1821 = vmul.f32 %v1820, 1.442695
  %v1822 = vpow.pop %v1821
  %v1823 = vadd.f32 %v1822, 1.0
  %v1824 = vrcp.pop %v1823
  %v1825 = vmul.f32 1.0, %v1824
  %v1826 = vmul.f32 %v1825, 2.0
  %v1827 = vsub.f32 %v1826, 1.0
  %v1828 = vmul.f32 %v1825, %v1734
  %1830 = vrot.lane.b32.xlu0 %v1827, 64
  %v1831 = vpop.permute.xlu0 %1830
  %v1833 = vmul.f32 %v1825, %v1831
  %1835 = vrot.lane.b32.xlu0 %v1833, 32
  %v1836 = vpop.permute.xlu0 %1835
  %v1838 = vadd.f32 %v1828, %v1836
  %v1839 = vtanh.pop %v1838
  %1841 = vrot.lane.b32.xlu0 %v1839, 64
  %v1842 = vpop.permute.xlu0 %1841
  %v1844 = vmul.f32 %v1825, %v1842
  %1846 = vrot.lane.b32.xlu0 %v1844, 32
  %v1847 = vpop.permute.xlu0 %1846
  %1849 = vst.msk [vmem:[#allocation2 + $0x7] sm:$0x1] %vm202, %v1847
  %v1850 = vld [vmem:[#allocation2] sm:$0xff]
  %v1851 = vld [vmem:[%s1 + $0x78] sm:$0xff]
  %v1852 = vld [vmem:[%s1 + $0x80] sm:$0xff]
  %v1853 = vld [vmem:[%s1 + $0x88] sm:$0xff]
  %v1854 = vld [vmem:[%s1 + $0x90] sm:$0xff]
  %v1855 = vld [vmem:[%s1 + $0x98] sm:$0x1]
  %v1856 = vlaneseq
  %v1857 = vshrl.u32 %v1856, 7
  %v1858 = vsub.s32 0, %v1857
  %v1859 = vrot.slane %v1855, %v1858
  %v1861 = vsel %vm98, %v1850, 0
  %1863 = vmatprep.subr.mxu0 0.0
  %1864 = vmatpush1.msra.mxu0 %v1851
  %1865 = vmatprep.subr.mxu0 0.0
  %1866 = vmatpush1.msra.mxu0 %v1852
  %1867 = vmatprep.subr.mxu0 0.0
  %1868 = vmatpush1.msra.mxu0 %v1853
  %1869 = vmatprep.subr.mxu0 0.0
  %1870 = vmatpush1.msra.mxu0 %v1854
  %1871 = vmatprep.subr.mxu0 0.0
  %1872 = vmatpush1.msra.mxu0 0.0
  %1873 = vmatprep.subr.mxu0 0.0
  %1874 = vmatpush1.msra.mxu0 0.0
  %1875 = vmatprep.subr.mxu0 0.0
  %1876 = vmatpush1.msra.mxu0 0.0
  %1877 = vmatprep.subr.mxu0 0.0
  %1878 = vmatpush1.msra.mxu0 0.0
  %1879 = vmatprep.subr.mxu0 0.0
  %1880 = vmatpush1.msra.mxu0 0.0
  %1881 = vmatprep.subr.mxu0 0.0
  %1882 = vmatpush1.msra.mxu0 0.0
  %1883 = vmatprep.subr.mxu0 0.0
  %1884 = vmatpush1.msra.mxu0 0.0
  %1885 = vmatprep.subr.mxu0 0.0
  %1886 = vmatpush1.msra.mxu0 0.0
  %1887 = vmatprep.subr.mxu0 0.0
  %1888 = vmatpush1.msra.mxu0 0.0
  %1889 = vmatprep.subr.mxu0 0.0
  %1890 = vmatpush1.msra.mxu0 0.0
  %1891 = vmatprep.subr.mxu0 0.0
  %1892 = vmatpush1.msra.mxu0 0.0
  %1893 = vmatprep.subr.mxu0 0.0
  %1894 = vmatpush1.msra.mxu0 0.0
  %1895 = vmatprep.subr.mxu0 0.0
  %1896 = vmatpush1.msra.mxu0 0.0
  %1897 = vmatprep.subr.mxu0 0.0
  %1898 = vmatpush1.msra.mxu0 0.0
  %1899 = vmatprep.subr.mxu0 0.0
  %1900 = vmatpush1.msra.mxu0 0.0
  %1901 = vmatprep.subr.mxu0 0.0
  %1902 = vmatpush1.msra.mxu0 0.0
  %1903 = vmatprep.subr.mxu0 0.0
  %1904 = vmatpush1.msra.mxu0 0.0
  %1905 = vmatprep.subr.mxu0 0.0
  %1906 = vmatpush1.msra.mxu0 0.0
  %1907 = vmatprep.subr.mxu0 0.0
  %1908 = vmatpush1.msra.mxu0 0.0
  %1909 = vmatprep.subr.mxu0 0.0
  %1910 = vmatpush1.msra.mxu0 0.0
  %1911 = vmatprep.subr.mxu0 0.0
  %1912 = vmatpush1.msra.mxu0 0.0
  %1913 = vmatprep.subr.mxu0 0.0
  %1914 = vmatpush1.msra.mxu0 0.0
  %1915 = vmatprep.subr.mxu0 0.0
  %1916 = vmatpush1.msra.mxu0 0.0
  %1917 = vmatprep.subr.mxu0 0.0
  %1918 = vmatpush1.msra.mxu0 0.0
  %1919 = vmatprep.subr.mxu0 0.0
  %1920 = vmatpush1.msra.mxu0 0.0
  %1921 = vmatprep.subr.mxu0 0.0
  %1922 = vmatpush1.msra.mxu0 0.0
  %1923 = vmatprep.subr.mxu0 0.0
  %1924 = vmatpush1.msra.mxu0 0.0
  %1925 = vmatprep.subr.mxu0 0.0
  %1926 = vmatpush1.msra.mxu0 0.0
  %1927 = vmatprep.mubr.f32.mxu0 0.0
  %1928 = vmatmul.mubr.f32.gmra.mrb[0].mxu0 %v1861
  %v1929 = vpop.f32.mrb[0].mxu0
  %v1930 = vadd.f32 %v1859, %v1929
  %v1931 = vpop.f32.mrb[0].mxu0
  %1932 = vdwg.mxu0
  %v1933 = vmax.f32 %v1930, 0.0
  %v1934 = vld [vmem:[%s1 + $0xa0] sm:$0xff]
  %v1935 = vld [vmem:[%s1 + $0xa8] sm:$0xff]
  %v1936 = vld [vmem:[%s1 + $0xb0] sm:$0xff]
  %v1937 = vld [vmem:[%s1 + $0xb8] sm:$0xff]
  %v1938 = vld [vmem:[%s1 + $0xc0] sm:$0xff]
  %v1939 = vld [vmem:[%s1 + $0xc8] sm:$0xff]
  %v1940 = vld [vmem:[%s1 + $0xd0] sm:$0xff]
  %v1941 = vld [vmem:[%s1 + $0xd8] sm:$0xff]
  %v1942 = vld [vmem:[%s1 + $0xe0] sm:$0x1]
  %v1943 = vlaneseq
  %v1944 = vshrl.u32 %v1943, 7
  %v1945 = vsub.s32 0, %v1944
  %v1946 = vrot.slane %v1942, %v1945
  %vm1947 = vcmask 523264
  %v1949 = vsel %vm1947, %v1933, 0
  %1951 = vmatprep.subr.mxu0 0.0
  %1952 = vmatpush1.msra.mxu0 %v1934
  %1953 = vmatprep.subr.mxu0 0.0
  %1954 = vmatpush1.msra.mxu0 %v1935
  %1955 = vmatprep.subr.mxu0 0.0
  %1956 = vmatpush1.msra.mxu0 %v1936
  %1957 = vmatprep.subr.mxu0 0.0
  %1958 = vmatpush1.msra.mxu0 %v1937
  %1959 = vmatprep.subr.mxu0 0.0
  %1960 = vmatpush1.msra.mxu0 %v1938
  %1961 = vmatprep.subr.mxu0 0.0
  %1962 = vmatpush1.msra.mxu0 %v1939
  %1963 = vmatprep.subr.mxu0 0.0
  %1964 = vmatpush1.msra.mxu0 %v1940
  %1965 = vmatprep.subr.mxu0 0.0
  %1966 = vmatpush1.msra.mxu0 %v1941
  %1967 = vmatprep.subr.mxu0 0.0
  %1968 = vmatpush1.msra.mxu0 0.0
  %1969 = vmatprep.subr.mxu0 0.0
  %1970 = vmatpush1.msra.mxu0 0.0
  %1971 = vmatprep.subr.mxu0 0.0
  %1972 = vmatpush1.msra.mxu0 0.0
  %1973 = vmatprep.subr.mxu0 0.0
  %1974 = vmatpush1.msra.mxu0 0.0
  %1975 = vmatprep.subr.mxu0 0.0
  %1976 = vmatpush1.msra.mxu0 0.0
  %1977 = vmatprep.subr.mxu0 0.0
  %1978 = vmatpush1.msra.mxu0 0.0
  %1979 = vmatprep.subr.mxu0 0.0
  %1980 = vmatpush1.msra.mxu0 0.0
  %1981 = vmatprep.subr.mxu0 0.0
  %1982 = vmatpush1.msra.mxu0 0.0
  %1983 = vmatprep.subr.mxu0 0.0
  %1984 = vmatpush1.msra.mxu0 0.0
  %1985 = vmatprep.subr.mxu0 0.0
  %1986 = vmatpush1.msra.mxu0 0.0
  %1987 = vmatprep.subr.mxu0 0.0
  %1988 = vmatpush1.msra.mxu0 0.0
  %1989 = vmatprep.subr.mxu0 0.0
  %1990 = vmatpush1.msra.mxu0 0.0
  %1991 = vmatprep.subr.mxu0 0.0
  %1992 = vmatpush1.msra.mxu0 0.0
  %1993 = vmatprep.subr.mxu0 0.0
  %1994 = vmatpush1.msra.mxu0 0.0
  %1995 = vmatprep.subr.mxu0 0.0
  %1996 = vmatpush1.msra.mxu0 0.0
  %1997 = vmatprep.subr.mxu0 0.0
  %1998 = vmatpush1.msra.mxu0 0.0
  %1999 = vmatprep.subr.mxu0 0.0
  %2000 = vmatpush1.msra.mxu0 0.0
  %2001 = vmatprep.subr.mxu0 0.0
  %2002 = vmatpush1.msra.mxu0 0.0
  %2003 = vmatprep.subr.mxu0 0.0
  %2004 = vmatpush1.msra.mxu0 0.0
  %2005 = vmatprep.subr.mxu0 0.0
  %2006 = vmatpush1.msra.mxu0 0.0
  %2007 = vmatprep.subr.mxu0 0.0
  %2008 = vmatpush1.msra.mxu0 0.0
  %2009 = vmatprep.subr.mxu0 0.0
  %2010 = vmatpush1.msra.mxu0 0.0
  %2011 = vmatprep.subr.mxu0 0.0
  %2012 = vmatpush1.msra.mxu0 0.0
  %2013 = vmatprep.subr.mxu0 0.0
  %2014 = vmatpush1.msra.mxu0 0.0
  %2015 = vmatprep.mubr.f32.mxu0 0.0
  %2016 = vmatmul.mubr.f32.gmra.mrb[0].mxu0 %v1949
  %v2017 = vpop.f32.mrb[0].mxu0
  %v2018 = vadd.f32 %v1946, %v2017
  %v2019 = vpop.f32.mrb[0].mxu0
  %2020 = vdwg.mxu0
  %v2021 = vmax.f32 %v2018, 0.0
  %v2022 = vld [vmem:[%s1 + $0xe8] sm:$0x1]
  %v2023 = vld [vmem:[%s1 + $0xf0] sm:$0x1]
  %2025 = vset.pattern.permute.xlu0 0
  %2026 = vperm.xlu0 %2025, %v2023
  %v2027 = vpop.permute.xlu0 %2026
  %v2030 = vsel %vm98, %v2022, 0
  %v2033 = vsel %vm98, %v2021, 0
  %2035 = vmatprep.subr.mxu0 0.0
  %2036 = vmatpush1.xpose.msra.mxu0 %v2033
  %2037 = vmatprep.subr.mxu0 0.0
  %2038 = vmatpush1.xpose.msra.mxu0 0.0
  %2039 = vmatprep.subr.mxu0 0.0
  %2040 = vmatpush1.xpose.msra.mxu0 0.0
  %2041 = vmatprep.subr.mxu0 0.0
  %2042 = vmatpush1.xpose.msra.mxu0 0.0
  %2043 = vmatprep.subr.mxu0 0.0
  %2044 = vmatpush1.xpose.msra.mxu0 0.0
  %2045 = vmatprep.subr.mxu0 0.0
  %2046 = vmatpush1.xpose.msra.mxu0 0.0
  %2047 = vmatprep.subr.mxu0 0.0
  %2048 = vmatpush1.xpose.msra.mxu0 0.0
  %2049 = vmatprep.subr.mxu0 0.0
  %2050 = vmatpush1.xpose.msra.mxu0 0.0
  %2051 = vmatprep.subr.mxu0 0.0
  %2052 = vmatpush1.xpose.msra.mxu0 0.0
  %2053 = vmatprep.subr.mxu0 0.0
  %2054 = vmatpush1.xpose.msra.mxu0 0.0
  %2055 = vmatprep.subr.mxu0 0.0
  %2056 = vmatpush1.xpose.msra.mxu0 0.0
  %2057 = vmatprep.subr.mxu0 0.0
  %2058 = vmatpush1.xpose.msra.mxu0 0.0
  %2059 = vmatprep.subr.mxu0 0.0
  %2060 = vmatpush1.xpose.msra.mxu0 0.0
  %2061 = vmatprep.subr.mxu0 0.0
  %2062 = vmatpush1.xpose.msra.mxu0 0.0
  %2063 = vmatprep.subr.mxu0 0.0
  %2064 = vmatpush1.xpose.msra.mxu0 0.0
  %2065 = vmatprep.subr.mxu0 0.0
  %2066 = vmatpush1.xpose.msra.mxu0 0.0
  %2067 = vmatprep.subr.mxu0 0.0
  %2068 = vmatpush1.xpose.msra.mxu0 0.0
  %2069 = vmatprep.subr.mxu0 0.0
  %2070 = vmatpush1.xpose.msra.mxu0 0.0
  %2071 = vmatprep.subr.mxu0 0.0
  %2072 = vmatpush1.xpose.msra.mxu0 0.0
  %2073 = vmatprep.subr.mxu0 0.0
  %2074 = vmatpush1.xpose.msra.mxu0 0.0
  %2075 = vmatprep.subr.mxu0 0.0
  %2076 = vmatpush1.xpose.msra.mxu0 0.0
  %2077 = vmatprep.subr.mxu0 0.0
  %2078 = vmatpush1.xpose.msra.mxu0 0.0
  %2079 = vmatprep.subr.mxu0 0.0
  %2080 = vmatpush1.xpose.msra.mxu0 0.0
  %2081 = vmatprep.subr.mxu0 0.0
  %2082 = vmatpush1.xpose.msra.mxu0 0.0
  %2083 = vmatprep.subr.mxu0 0.0
  %2084 = vmatpush1.xpose.msra.mxu0 0.0
  %2085 = vmatprep.subr.mxu0 0.0
  %2086 = vmatpush1.xpose.msra.mxu0 0.0
  %2087 = vmatprep.subr.mxu0 0.0
  %2088 = vmatpush1.xpose.msra.mxu0 0.0
  %2089 = vmatprep.subr.mxu0 0.0
  %2090 = vmatpush1.xpose.msra.mxu0 0.0
  %2091 = vmatprep.subr.mxu0 0.0
  %2092 = vmatpush1.xpose.msra.mxu0 0.0
  %2093 = vmatprep.subr.mxu0 0.0
  %2094 = vmatpush1.xpose.msra.mxu0 0.0
  %2095 = vmatprep.subr.mxu0 0.0
  %2096 = vmatpush1.xpose.msra.mxu0 0.0
  %2097 = vmatprep.subr.mxu0 0.0
  %2098 = vmatpush1.xpose.msra.mxu0 0.0
  %2099 = vmatprep.mubr.f32.mxu0 0.0
  %2100 = vmatmul.mubr.f32.gmra.mrb[0].mxu0 %v2030
  %v2101 = vpop.f32.mrb[0].mxu0
  %v2102 = vadd.f32 %v2027, %v2101
  %v2103 = vpop.f32.mrb[0].mxu0
  %2104 = vdwg.mxu0
  %vm2105 = vcmask 57344
  %2106 = vst.msk [vmem:[%s2] sm:$0x1] %vm2105, %v2102
  %v2107 = vxor.u32 %v2102, 2147483648
  %v2108 = vmul.f32 %v2107, 1.442695
  %v2109 = vpow.pop %v2108
  %v2110 = vadd.f32 %v2109, 1.0
  %v2111 = vrcp.pop %v2110
  %v2112 = vmul.f32 1.0, %v2111
  %2113 = vst.msk [vmem:[%s2 + $0x1] sm:$0x1] %vm2105, %v2112
  // Predicated region
  $region10: #{base_rtf_forward.1} parent=0 // pred_check
    _
  $region11: #{base_rtf_forward.1} parent=0 // pred_check_branch
    %2115 = sbr.rel (0) target = $region13
  $region12: #{base_rtf_forward.1} parent=0 // pred_region
    _
  $region13: #{base_rtf_forward.1} parent=0 // pred_fallthru
    _
  // Predicated region
  $region14: #{base_rtf_forward.1} parent=0 // pred_check
    _
  $region15: #{base_rtf_forward.1} parent=0 // pred_check_branch
    %2117 = sbr.rel (0) target = $region17
  $region16: #{base_rtf_forward.1} parent=0 // pred_region
    _
  $region17: #{base_rtf_forward.1} parent=0 // pred_fallthru
    _

</llo_original>
